<compile_context>
chip_gen: v7x
topology: tpu7x:2x2x1
jax: 0.10.0
libtpu: 0.0.40
codegen_flags: <defaults>
</compile_context>

<pallas_src>
import functools

import jax
import jax.numpy as jnp
import numpy as np
from jax.experimental import pallas as pl
from jax.experimental.pallas import tpu as pltpu


def _build_tap_masks(H, W):
    """(9, H*W) f32 validity masks for the 3x3 taps on the flattened H*W axis."""
    hw = H * W
    p = np.arange(hw)
    h = p // W
    w = p % W
    masks = []
    for dy in range(3):
        for dx in range(3):
            valid = ((h + dy - 1 >= 0) & (h + dy - 1 < H)
                     & (w + dx - 1 >= 0) & (w + dx - 1 < W))
            masks.append(valid)
    return jnp.asarray(np.stack(masks, axis=0).astype(np.float32))


def _bottleneck_kernel(x_ref, w1_ref, w3_ref, masks_ref,
                       wfc1_ref, wfc2_ref, wfu1g_ref, wfu1o_ref,
                       wfu2_ref, w5_ref, sb_w_ref, sb_o_ref,
                       o_ref, *, W, HW):
    f32 = jnp.float32
    bf16 = jnp.bfloat16
    width = w1_ref.shape[0]

    # Packed per-channel scale/bias columns.
    s1 = sb_w_ref[:, 0:1]
    b1 = sb_w_ref[:, 1:2]
    bfc1 = sb_w_ref[:, 2:3]
    bfc2 = sb_w_ref[:, 3:4]
    bfu1 = sb_w_ref[:, 4:5]
    bfu2 = sb_w_ref[:, 5:6]
    s2 = sb_w_ref[:, 6:7]
    b2 = sb_w_ref[:, 7:8]
    s3 = sb_o_ref[:, 0:1]
    b3 = sb_o_ref[:, 1:2]

    x = x_ref[...].astype(f32)                        # (C_in, HW)
    x_bf = x.astype(bf16)

    # --- conv1 (1x1, bf16 MXU) + bn1 + relu ---------------------------------
    t = jnp.dot(w1_ref[...], x_bf, preferred_element_type=f32)
    t = jnp.maximum(t * s1 + b1, 0.0)                 # (width, HW) f32

    # --- conv2 3x3 (pad=1): 8 edge-masked lane rolls (XLU) + centre tap,
    #     stacked into one (9*width, HW) operand -> single K=9*width MXU dot.
    taps = []
    tap = 0
    for dy in range(3):
        for dx in range(3):
            s = (dy - 1) * W + (dx - 1)
            shifted = t if s == 0 else pltpu.roll(t, shift=(-s) % HW, axis=1)
            if tap != 4:                              # centre tap needs no mask
                shifted = shifted * masks_ref[tap:tap + 1, :]
            taps.append(shifted)
            tap += 1
    t_stack = jnp.concatenate(taps, axis=0)           # (9*width, HW) f32
    out3 = jnp.dot(w3_ref[...], t_stack.astype(bf16),
                   preferred_element_type=f32)        # (width, HW)

    # --- GAP branch on the MXU (keeps the XLU free for the rolls) ------------
    ones_col = jnp.ones((HW, 1), bf16)
    g = jnp.dot(x_bf, ones_col, preferred_element_type=f32) * (1.0 / HW)  # (C_in,1)
    g = jnp.maximum(
        jnp.dot(wfc1_ref[...], g, preferred_element_type=f32) + bfc1, 0.0)
    g = jnp.dot(wfc2_ref[...], g, preferred_element_type=f32) + bfc2      # (width,1)
    # Bilinear 1x1 -> HxW upsample (align_corners=True) is just a broadcast of
    # this column; keep it as (width, 1) and broadcast lazily.

    # --- fusion_conv1(cat([gmap, out3])) = const column + spatial matmul -----
    f_const = jnp.dot(wfu1g_ref[...], g, preferred_element_type=f32) + bfu1
    f1 = jnp.maximum(
        jnp.dot(wfu1o_ref[...], out3.astype(bf16), preferred_element_type=f32)
        + f_const, 0.0)                               # (width, HW)

    # --- fusion_conv2 + sigmoid gate ------------------------------------------
    f2 = (jnp.dot(wfu2_ref[...], f1.astype(bf16), preferred_element_type=f32)
          + bfu2)
    gate = pl.reciprocal(1.0 + jnp.exp(-f2), approx=False)

    # --- out3 + gmap * gate ; bn2 ; relu --------------------------------------
    h = jnp.maximum((out3 + g * gate) * s2 + b2, 0.0)

    # --- conv3 (1x1) + bn3 + residual + relu ----------------------------------
    o = jnp.dot(w5_ref[...], h.astype(bf16), preferred_element_type=f32)
    o_ref[...] = jnp.maximum(o * s3 + b3 + x, 0.0).astype(o_ref.dtype)


def prepare_params(p, H, W):
    """One-time host-side prep: fuse 3x3 weight, pack scale/bias, bf16 casts."""
    width = p['w1'].shape[0]
    col = lambda v: jnp.asarray(v, jnp.float32).reshape(-1, 1)
    bf = lambda a: jnp.asarray(a, jnp.bfloat16)
    # 3x3 conv as a single (width, 9*width) matrix; column block `tap`
    # multiplies the tap-`tap` shifted copy of t (same loop order as kernel).
    w3fused = jnp.concatenate(
        [p['w_conv2'][:, :, dy, dx] for dy in range(3) for dx in range(3)],
        axis=1)
    sb_w = jnp.concatenate([col(p['s1']), col(p['b1']),
                            col(p['bfc1']), col(p['bfc2']),
                            col(p['bfu1']), col(p['bfu2']),
                            col(p['s2']), col(p['b2'])], axis=1)   # (width, 8)
    sb_o = jnp.concatenate([col(p['s3']), col(p['b3'])], axis=1)   # (C_out, 2)
    return dict(
        w1=bf(p['w1']),                              # (width, C_in) bf16
        w3=bf(w3fused),                              # (width, 9*width) bf16
        masks=_build_tap_masks(H, W),                # (9, HW) f32
        wfc1=jnp.asarray(p['wfc1'], jnp.float32),    # tiny column branch: f32
        wfc2=jnp.asarray(p['wfc2'], jnp.float32),
        wfu1g=jnp.asarray(p['wfu1'][:, :width], jnp.float32),
        wfu1o=bf(p['wfu1'][:, width:]),              # spatial half: bf16
        wfu2=bf(p['wfu2']),
        w5=bf(p['w5']),
        sb_w=sb_w, sb_o=sb_o)


def _vmem_limit_bytes(C_in, C_out, width, HW, x_dtype):
    isz = jnp.dtype(x_dtype).itemsize
    io_bytes = 2 * (C_in + C_out) * HW * isz                 # double-buffered I/O
    const = (2 * width * C_in + 2 * width * 9 * width + 4 * 9 * HW
             + 4 * width * C_in + 4 * width * width * 3
             + 2 * width * width * 2 + 2 * C_out * width
             + 4 * width * 8 + 4 * C_out * 2)
    inter = (4 * HW * (C_in + 5 * width + C_out)             # f32 maps
             + 4 * HW * 9 * width                            # f32 tap stack
             + 2 * HW * (9 * width + 3 * width + C_out + C_in))  # bf16 copies
    est = io_bytes + 2 * const + inter
    return int(min(max(2 * est, 16 * 1024 * 1024), 48 * 1024 * 1024))


def pixel_aware_bottleneck_forward(x, prep):
    """x: (B, C_in, H, W); prep: dict from prepare_params()."""
    B, C_in, H, W = x.shape
    HW = H * W
    width = prep['w1'].shape[0]
    C_out = prep['w5'].shape[0]
    assert C_out == C_in, "residual needs inplanes == planes*expansion (downsample=None)"

    # Layout-preserving reshape only; no pad / slice HBM round-trips. The
    # full-extent last-dim block is exempt from the 128-lane rule.
    x3 = x.reshape(B, C_in, HW)

    kernel = functools.partial(_bottleneck_kernel, W=W, HW=HW)
    const2 = lambda b: (0, 0)

    in_specs = [
        pl.BlockSpec((None, C_in, HW), lambda b: (b, 0, 0)),  # x
        pl.BlockSpec((width, C_in), const2),                  # conv1 weight (bf16)
        pl.BlockSpec((width, 9 * width), const2),             # fused 3x3 weight (bf16)
        pl.BlockSpec((9, HW), const2),                        # tap masks
        pl.BlockSpec((width, C_in), const2),                  # fc1 weight
        pl.BlockSpec((width, width), const2),                 # fc2 weight
        pl.BlockSpec((width, width), const2),                 # fusion1 (gap half)
        pl.BlockSpec((width, width), const2),                 # fusion1 (conv half, bf16)
        pl.BlockSpec((width, width), const2),                 # fusion2 (bf16)
        pl.BlockSpec((C_out, width), const2),                 # conv3 weight (bf16)
        pl.BlockSpec((width, 8), const2),                     # packed scale/bias (width)
        pl.BlockSpec((C_out, 2), const2),                     # packed bn3 scale/bias
    ]

    out = pl.pallas_call(
        kernel,
        out_shape=jax.ShapeDtypeStruct((B, C_out, HW), x.dtype),
        grid_spec=pltpu.PrefetchScalarGridSpec(
            num_scalar_prefetch=0,
            grid=(B,),
            in_specs=in_specs,
            out_specs=pl.BlockSpec((None, C_out, HW), lambda b: (b, 0, 0)),
        ),
        compiler_params=pltpu.CompilerParams(
            dimension_semantics=("parallel",),
            vmem_limit_bytes=_vmem_limit_bytes(C_in, C_out, width, HW, x.dtype)),
    )(x3, prep['w1'], prep['w3'], prep['masks'],
      prep['wfc1'], prep['wfc2'], prep['wfu1g'], prep['wfu1o'],
      prep['wfu2'], prep['w5'], prep['sb_w'], prep['sb_o'])

    return out.reshape(B, C_out, H, W)


def reference_forward(x, p):
    """Pure-JAX reference mirroring the PyTorch forward (inference-mode BN)."""
    hp = jax.lax.Precision.HIGHEST
    B, C_in, H, W = x.shape
    width = p['w1'].shape[0]

    def pw(w, t):          # 1x1 conv over channels
        return jnp.einsum('oc,bchw->bohw', w, t, precision=hp)

    def bn(t, scale, bias):
        return t * scale[None, :, None, None] + bias[None, :, None, None]

    t = jax.nn.relu(bn(pw(p['w1'], x), p['s1'], p['b1']))
    o3 = jax.lax.conv_general_dilated(
        t, p['w_conv2'], window_strides=(1, 1), padding=((1, 1), (1, 1)),
        dimension_numbers=('NCHW', 'OIHW', 'NCHW'), precision=hp)
    g = jnp.mean(x, axis=(2, 3), keepdims=True)
    g = jax.nn.relu(pw(p['wfc1'], g) + p['bfc1'][None, :, None, None])
    g = pw(p['wfc2'], g) + p['bfc2'][None, :, None, None]
    gmap = jnp.broadcast_to(g, (B, width, H, W))   # bilinear 1x1->HxW, align_corners=True
    f = jax.nn.relu(pw(p['wfu1'], jnp.concatenate([gmap, o3], axis=1))
                    + p['bfu1'][None, :, None, None])
    f = pw(p['wfu2'], f) + p['bfu2'][None, :, None, None]
    gate = jax.nn.sigmoid(f)
    h = jax.nn.relu(bn(o3 + gmap * gate, p['s2'], p['b2']))
    o = bn(pw(p['w5'], h), p['s3'], p['b3'])
    return jax.nn.relu(o + x)


if __name__ == "__main__":
    key = jax.random.PRNGKey(0)
    keys = jax.random.split(key, 16)

    # Small shapes consistent with the module: residual (downsample=None)
    # requires inplanes == planes * expansion.  width = planes for base_width=64.
    B, inplanes, H, W = 2, 32, 16, 16
    planes = 8
    width = planes
    C_out = planes * 4
    assert C_out == inplanes

    def w_init(k, shape, fan_in):
        return jax.random.normal(k, shape, jnp.float32) / np.sqrt(float(fan_in))

    def bn_fold(k, c):
        k1, k2, k3, k4 = jax.random.split(k, 4)
        gamma = 1.0 + 0.1 * jax.random.normal(k1, (c,), jnp.float32)
        beta = 0.1 * jax.random.normal(k2, (c,), jnp.float32)
        mean = 0.1 * jax.random.normal(k3, (c,), jnp.float32)
        var = 1.0 + 0.1 * jnp.abs(jax.random.normal(k4, (c,), jnp.float32))
        scale = gamma / jnp.sqrt(var + 1e-5)
        return scale, beta - mean * scale

    x = jax.random.normal(keys[0], (B, inplanes, H, W), jnp.float32)

    s1, b1 = bn_fold(keys[12], width)
    s2, b2 = bn_fold(keys[13], width)
    s3, b3 = bn_fold(keys[14], C_out)

    params = dict(
        w1=w_init(keys[1], (width, inplanes), inplanes),            # conv1 (no bias)
        w_conv2=w_init(keys[2], (width, width, 3, 3), width * 9),   # conv2_3x3 (no bias)
        wfc1=w_init(keys[3], (width, inplanes), inplanes),          # fc1 (1x1, bias)
        bfc1=0.1 * jax.random.normal(keys[4], (width,), jnp.float32),
        wfc2=w_init(keys[5], (width, width), width),                # fc2 (1x1, bias)
        bfc2=0.1 * jax.random.normal(keys[6], (width,), jnp.float32),
        wfu1=w_init(keys[7], (width, 2 * width), 2 * width),        # fusion_conv1
        bfu1=0.1 * jax.random.normal(keys[8], (width,), jnp.float32),
        wfu2=w_init(keys[9], (width, width), width),                # fusion_conv2
        bfu2=0.1 * jax.random.normal(keys[10], (width,), jnp.float32),
        w5=w_init(keys[11], (C_out, width), width),                 # conv3 (no bias)
        s1=s1, b1=b1, s2=s2, b2=b2, s3=s3, b3=b3,                   # folded BN params
    )

    # One-time host-side prep (weight fusion / packing / bf16 casts), then a
    # jitted forward that calls the Pallas kernel.
    prep = prepare_params(params, H, W)
    fwd = jax.jit(pixel_aware_bottleneck_forward)
    out = jax.block_until_ready(fwd(x, prep))

    ref = reference_forward(x, params)
    assert out.shape == (B, C_out, H, W)
    max_err = float(jnp.max(jnp.abs(out - ref)))
    # Tolerance relaxed vs the f32 version because the MXU now runs on bf16
    # operands (f32 accumulation); errors stay in the ~1e-2 range here.
    assert max_err < 5e-2, "mismatch vs reference: max abs err = %g" % max_err

    print("KERNEL_OK")
</pallas_src>

<mosaic_0001>
module attributes {stable_mosaic.version = 11 : i64} {
  func.func @_bottleneck_kernel(%arg0: i32, %arg1: memref<1x32x256xf32, #tpu.memory_space<vmem>>, %arg2: memref<8x32xbf16, #tpu.memory_space<vmem>>, %arg3: memref<8x72xbf16, #tpu.memory_space<vmem>>, %arg4: memref<9x256xf32, #tpu.memory_space<vmem>>, %arg5: memref<8x32xf32, #tpu.memory_space<vmem>>, %arg6: memref<8x8xf32, #tpu.memory_space<vmem>>, %arg7: memref<8x8xf32, #tpu.memory_space<vmem>>, %arg8: memref<8x8xbf16, #tpu.memory_space<vmem>>, %arg9: memref<8x8xbf16, #tpu.memory_space<vmem>>, %arg10: memref<32x8xbf16, #tpu.memory_space<vmem>>, %arg11: memref<8x8xf32, #tpu.memory_space<vmem>>, %arg12: memref<32x2xf32, #tpu.memory_space<vmem>>, %arg13: memref<1x32x256xf32, #tpu.memory_space<vmem>>) attributes {dimension_semantics = [#tpu.dimension_semantics<parallel>], iteration_bounds = array<i64: 2>, scalar_prefetch = 0 : i64, scratch_operands = 0 : i64, tpu.core_type = #tpu.core_type<tc>, window_params = [{transform_indices = @transform_0, window_bounds = array<i64: 1, 32, 256>}, {pipeline_mode = #tpu.pipeline_mode<synchronous>, transform_indices = @transform_1, window_bounds = array<i64: 8, 32>}, {pipeline_mode = #tpu.pipeline_mode<synchronous>, transform_indices = @transform_2, window_bounds = array<i64: 8, 72>}, {pipeline_mode = #tpu.pipeline_mode<synchronous>, transform_indices = @transform_3, window_bounds = array<i64: 9, 256>}, {pipeline_mode = #tpu.pipeline_mode<synchronous>, transform_indices = @transform_4, window_bounds = array<i64: 8, 32>}, {pipeline_mode = #tpu.pipeline_mode<synchronous>, transform_indices = @transform_5, window_bounds = array<i64: 8, 8>}, {pipeline_mode = #tpu.pipeline_mode<synchronous>, transform_indices = @transform_6, window_bounds = array<i64: 8, 8>}, {pipeline_mode = #tpu.pipeline_mode<synchronous>, transform_indices = @transform_7, window_bounds = array<i64: 8, 8>}, {pipeline_mode = #tpu.pipeline_mode<synchronous>, transform_indices = @transform_8, window_bounds = array<i64: 8, 8>}, {pipeline_mode = #tpu.pipeline_mode<synchronous>, transform_indices = @transform_9, window_bounds = array<i64: 32, 8>}, {pipeline_mode = #tpu.pipeline_mode<synchronous>, transform_indices = @transform_10, window_bounds = array<i64: 8, 8>}, {pipeline_mode = #tpu.pipeline_mode<synchronous>, transform_indices = @transform_11, window_bounds = array<i64: 32, 2>}, {transform_indices = @transform_12, window_bounds = array<i64: 1, 32, 256>}]} {
    %c0 = arith.constant 0 : index
    %c0_0 = arith.constant 0 : index
    %0 = vector.load %arg11[%c0, %c0_0] : memref<8x8xf32, #tpu.memory_space<vmem>>, vector<8x1xf32>
    %c0_1 = arith.constant 0 : index
    %c1 = arith.constant 1 : index
    %1 = vector.load %arg11[%c0_1, %c1] : memref<8x8xf32, #tpu.memory_space<vmem>>, vector<8x1xf32>
    %c0_2 = arith.constant 0 : index
    %c2 = arith.constant 2 : index
    %2 = vector.load %arg11[%c0_2, %c2] : memref<8x8xf32, #tpu.memory_space<vmem>>, vector<8x1xf32>
    %c0_3 = arith.constant 0 : index
    %c3 = arith.constant 3 : index
    %3 = vector.load %arg11[%c0_3, %c3] : memref<8x8xf32, #tpu.memory_space<vmem>>, vector<8x1xf32>
    %c0_4 = arith.constant 0 : index
    %c4 = arith.constant 4 : index
    %4 = vector.load %arg11[%c0_4, %c4] : memref<8x8xf32, #tpu.memory_space<vmem>>, vector<8x1xf32>
    %c0_5 = arith.constant 0 : index
    %c5 = arith.constant 5 : index
    %5 = vector.load %arg11[%c0_5, %c5] : memref<8x8xf32, #tpu.memory_space<vmem>>, vector<8x1xf32>
    %c0_6 = arith.constant 0 : index
    %c6 = arith.constant 6 : index
    %6 = vector.load %arg11[%c0_6, %c6] : memref<8x8xf32, #tpu.memory_space<vmem>>, vector<8x1xf32>
    %c0_7 = arith.constant 0 : index
    %c7 = arith.constant 7 : index
    %7 = vector.load %arg11[%c0_7, %c7] : memref<8x8xf32, #tpu.memory_space<vmem>>, vector<8x1xf32>
    %c0_8 = arith.constant 0 : index
    %c0_9 = arith.constant 0 : index
    %8 = vector.load %arg12[%c0_8, %c0_9] : memref<32x2xf32, #tpu.memory_space<vmem>>, vector<32x1xf32>
    %c0_10 = arith.constant 0 : index
    %c1_11 = arith.constant 1 : index
    %9 = vector.load %arg12[%c0_10, %c1_11] : memref<32x2xf32, #tpu.memory_space<vmem>>, vector<32x1xf32>
    %c0_12 = arith.constant 0 : index
    %c0_13 = arith.constant 0 : index
    %c0_14 = arith.constant 0 : index
    %10 = vector.load %arg1[%c0_12, %c0_13, %c0_14] : memref<1x32x256xf32, #tpu.memory_space<vmem>>, vector<1x32x256xf32>
    %11 = vector.shape_cast %10 : vector<1x32x256xf32> to vector<32x256xf32>
    %12 = arith.truncf %11 : vector<32x256xf32> to vector<32x256xbf16>
    %c0_15 = arith.constant 0 : index
    %c0_16 = arith.constant 0 : index
    %13 = vector.load %arg2[%c0_15, %c0_16] : memref<8x32xbf16, #tpu.memory_space<vmem>>, vector<8x32xbf16>
    %cst = arith.constant dense<0.000000e+00> : vector<8x256xf32>
    %14 = tpu.matmul %13, %12, %cst {dimension_numbers = #tpu.dot_dimension_numbers<[1], [0], [0], [1], [0, 0, 1, 1], [], []>} : vector<8x32xbf16>, vector<32x256xbf16>, vector<8x256xf32> -> vector<8x256xf32>
    %15 = vector.broadcast %0 : vector<8x1xf32> to vector<8x256xf32>
    %16 = arith.mulf %14, %15 : vector<8x256xf32>
    %17 = vector.broadcast %1 : vector<8x1xf32> to vector<8x256xf32>
    %18 = arith.addf %16, %17 : vector<8x256xf32>
    %cst_17 = arith.constant 0.000000e+00 : f32
    %19 = vector.broadcast %cst_17 : f32 to vector<8x256xf32>
    %20 = arith.maximumf %18, %19 : vector<8x256xf32>
    %c17_i32 = arith.constant 17 : i32
    %21 = tpu.dynamic_rotate %20 by %c17_i32 dim 1 : vector<8x256xf32>, i32 -> vector<8x256xf32>
    %c0_18 = arith.constant 0 : index
    %c0_19 = arith.constant 0 : index
    %22 = vector.load %arg4[%c0_18, %c0_19] : memref<9x256xf32, #tpu.memory_space<vmem>>, vector<1x256xf32>
    %23 = vector.broadcast %22 : vector<1x256xf32> to vector<8x256xf32>
    %24 = arith.mulf %21, %23 : vector<8x256xf32>
    %c16_i32 = arith.constant 16 : i32
    %25 = tpu.dynamic_rotate %20 by %c16_i32 dim 1 : vector<8x256xf32>, i32 -> vector<8x256xf32>
    %c1_20 = arith.constant 1 : index
    %c0_21 = arith.constant 0 : index
    %26 = vector.load %arg4[%c1_20, %c0_21] : memref<9x256xf32, #tpu.memory_space<vmem>>, vector<1x256xf32>
    %27 = vector.broadcast %26 : vector<1x256xf32> to vector<8x256xf32>
    %28 = arith.mulf %25, %27 : vector<8x256xf32>
    %c15_i32 = arith.constant 15 : i32
    %29 = tpu.dynamic_rotate %20 by %c15_i32 dim 1 : vector<8x256xf32>, i32 -> vector<8x256xf32>
    %c2_22 = arith.constant 2 : index
    %c0_23 = arith.constant 0 : index
    %30 = vector.load %arg4[%c2_22, %c0_23] : memref<9x256xf32, #tpu.memory_space<vmem>>, vector<1x256xf32>
    %31 = vector.broadcast %30 : vector<1x256xf32> to vector<8x256xf32>
    %32 = arith.mulf %29, %31 : vector<8x256xf32>
    %c1_i32 = arith.constant 1 : i32
    %33 = tpu.dynamic_rotate %20 by %c1_i32 dim 1 : vector<8x256xf32>, i32 -> vector<8x256xf32>
    %c3_24 = arith.constant 3 : index
    %c0_25 = arith.constant 0 : index
    %34 = vector.load %arg4[%c3_24, %c0_25] : memref<9x256xf32, #tpu.memory_space<vmem>>, vector<1x256xf32>
    %35 = vector.broadcast %34 : vector<1x256xf32> to vector<8x256xf32>
    %36 = arith.mulf %33, %35 : vector<8x256xf32>
    %c255_i32 = arith.constant 255 : i32
    %37 = tpu.dynamic_rotate %20 by %c255_i32 dim 1 : vector<8x256xf32>, i32 -> vector<8x256xf32>
    %c5_26 = arith.constant 5 : index
    %c0_27 = arith.constant 0 : index
    %38 = vector.load %arg4[%c5_26, %c0_27] : memref<9x256xf32, #tpu.memory_space<vmem>>, vector<1x256xf32>
    %39 = vector.broadcast %38 : vector<1x256xf32> to vector<8x256xf32>
    %40 = arith.mulf %37, %39 : vector<8x256xf32>
    %c241_i32 = arith.constant 241 : i32
    %41 = tpu.dynamic_rotate %20 by %c241_i32 dim 1 : vector<8x256xf32>, i32 -> vector<8x256xf32>
    %c6_28 = arith.constant 6 : index
    %c0_29 = arith.constant 0 : index
    %42 = vector.load %arg4[%c6_28, %c0_29] : memref<9x256xf32, #tpu.memory_space<vmem>>, vector<1x256xf32>
    %43 = vector.broadcast %42 : vector<1x256xf32> to vector<8x256xf32>
    %44 = arith.mulf %41, %43 : vector<8x256xf32>
    %c240_i32 = arith.constant 240 : i32
    %45 = tpu.dynamic_rotate %20 by %c240_i32 dim 1 : vector<8x256xf32>, i32 -> vector<8x256xf32>
    %c7_30 = arith.constant 7 : index
    %c0_31 = arith.constant 0 : index
    %46 = vector.load %arg4[%c7_30, %c0_31] : memref<9x256xf32, #tpu.memory_space<vmem>>, vector<1x256xf32>
    %47 = vector.broadcast %46 : vector<1x256xf32> to vector<8x256xf32>
    %48 = arith.mulf %45, %47 : vector<8x256xf32>
    %c239_i32 = arith.constant 239 : i32
    %49 = tpu.dynamic_rotate %20 by %c239_i32 dim 1 : vector<8x256xf32>, i32 -> vector<8x256xf32>
    %c8 = arith.constant 8 : index
    %c0_32 = arith.constant 0 : index
    %50 = vector.load %arg4[%c8, %c0_32] : memref<9x256xf32, #tpu.memory_space<vmem>>, vector<1x256xf32>
    %51 = vector.broadcast %50 : vector<1x256xf32> to vector<8x256xf32>
    %52 = arith.mulf %49, %51 : vector<8x256xf32>
    %53 = tpu.concatenate %24, %28, %32, %36, %20, %40, %44, %48, %52 in 0 : vector<8x256xf32>, vector<8x256xf32>, vector<8x256xf32>, vector<8x256xf32>, vector<8x256xf32>, vector<8x256xf32>, vector<8x256xf32>, vector<8x256xf32>, vector<8x256xf32> -> vector<72x256xf32>
    %c0_33 = arith.constant 0 : index
    %c0_34 = arith.constant 0 : index
    %54 = vector.load %arg3[%c0_33, %c0_34] : memref<8x72xbf16, #tpu.memory_space<vmem>>, vector<8x72xbf16>
    %55 = arith.truncf %53 : vector<72x256xf32> to vector<72x256xbf16>
    %cst_35 = arith.constant dense<0.000000e+00> : vector<8x256xf32>
    %56 = tpu.matmul %54, %55, %cst_35 {dimension_numbers = #tpu.dot_dimension_numbers<[1], [0], [0], [1], [0, 0, 1, 1], [], []>} : vector<8x72xbf16>, vector<72x256xbf16>, vector<8x256xf32> -> vector<8x256xf32>
    %cst_36 = arith.constant 1.000000e+00 : bf16
    %57 = vector.broadcast %cst_36 : bf16 to vector<256x1xbf16>
    %cst_37 = arith.constant dense<0.000000e+00> : vector<32x1xf32>
    %58 = tpu.matmul %12, %57, %cst_37 {dimension_numbers = #tpu.dot_dimension_numbers<[1], [0], [0], [1], [0, 0, 1, 1], [], []>} : vector<32x256xbf16>, vector<256x1xbf16>, vector<32x1xf32> -> vector<32x1xf32>
    %cst_38 = arith.constant 3.906250e-03 : f32
    %59 = vector.broadcast %cst_38 : f32 to vector<32x1xf32>
    %60 = arith.mulf %58, %59 : vector<32x1xf32>
    %c0_39 = arith.constant 0 : index
    %c0_40 = arith.constant 0 : index
    %61 = vector.load %arg5[%c0_39, %c0_40] : memref<8x32xf32, #tpu.memory_space<vmem>>, vector<8x32xf32>
    %cst_41 = arith.constant dense<0.000000e+00> : vector<8x1xf32>
    %62 = tpu.matmul %61, %60, %cst_41 {dimension_numbers = #tpu.dot_dimension_numbers<[1], [0], [0], [1], [0, 0, 1, 1], [], []>} : vector<8x32xf32>, vector<32x1xf32>, vector<8x1xf32> -> vector<8x1xf32>
    %63 = arith.addf %62, %2 : vector<8x1xf32>
    %cst_42 = arith.constant 0.000000e+00 : f32
    %64 = vector.broadcast %cst_42 : f32 to vector<8x1xf32>
    %65 = arith.maximumf %63, %64 : vector<8x1xf32>
    %c0_43 = arith.constant 0 : index
    %c0_44 = arith.constant 0 : index
    %66 = vector.load %arg6[%c0_43, %c0_44] : memref<8x8xf32, #tpu.memory_space<vmem>>, vector<8x8xf32>
    %cst_45 = arith.constant dense<0.000000e+00> : vector<8x1xf32>
    %67 = tpu.matmul %66, %65, %cst_45 {dimension_numbers = #tpu.dot_dimension_numbers<[1], [0], [0], [1], [0, 0, 1, 1], [], []>} : vector<8x8xf32>, vector<8x1xf32>, vector<8x1xf32> -> vector<8x1xf32>
    %68 = arith.addf %67, %3 : vector<8x1xf32>
    %c0_46 = arith.constant 0 : index
    %c0_47 = arith.constant 0 : index
    %69 = vector.load %arg7[%c0_46, %c0_47] : memref<8x8xf32, #tpu.memory_space<vmem>>, vector<8x8xf32>
    %cst_48 = arith.constant dense<0.000000e+00> : vector<8x1xf32>
    %70 = tpu.matmul %69, %68, %cst_48 {dimension_numbers = #tpu.dot_dimension_numbers<[1], [0], [0], [1], [0, 0, 1, 1], [], []>} : vector<8x8xf32>, vector<8x1xf32>, vector<8x1xf32> -> vector<8x1xf32>
    %71 = arith.addf %70, %4 : vector<8x1xf32>
    %c0_49 = arith.constant 0 : index
    %c0_50 = arith.constant 0 : index
    %72 = vector.load %arg8[%c0_49, %c0_50] : memref<8x8xbf16, #tpu.memory_space<vmem>>, vector<8x8xbf16>
    %73 = arith.truncf %56 : vector<8x256xf32> to vector<8x256xbf16>
    %cst_51 = arith.constant dense<0.000000e+00> : vector<8x256xf32>
    %74 = tpu.matmul %72, %73, %cst_51 {dimension_numbers = #tpu.dot_dimension_numbers<[1], [0], [0], [1], [0, 0, 1, 1], [], []>} : vector<8x8xbf16>, vector<8x256xbf16>, vector<8x256xf32> -> vector<8x256xf32>
    %75 = vector.broadcast %71 : vector<8x1xf32> to vector<8x256xf32>
    %76 = arith.addf %74, %75 : vector<8x256xf32>
    %cst_52 = arith.constant 0.000000e+00 : f32
    %77 = vector.broadcast %cst_52 : f32 to vector<8x256xf32>
    %78 = arith.maximumf %76, %77 : vector<8x256xf32>
    %c0_53 = arith.constant 0 : index
    %c0_54 = arith.constant 0 : index
    %79 = vector.load %arg9[%c0_53, %c0_54] : memref<8x8xbf16, #tpu.memory_space<vmem>>, vector<8x8xbf16>
    %80 = arith.truncf %78 : vector<8x256xf32> to vector<8x256xbf16>
    %cst_55 = arith.constant dense<0.000000e+00> : vector<8x256xf32>
    %81 = tpu.matmul %79, %80, %cst_55 {dimension_numbers = #tpu.dot_dimension_numbers<[1], [0], [0], [1], [0, 0, 1, 1], [], []>} : vector<8x8xbf16>, vector<8x256xbf16>, vector<8x256xf32> -> vector<8x256xf32>
    %82 = vector.broadcast %5 : vector<8x1xf32> to vector<8x256xf32>
    %83 = arith.addf %81, %82 : vector<8x256xf32>
    %cst_56 = arith.constant 0.000000e+00 : f32
    %84 = vector.broadcast %cst_56 : f32 to vector<8x256xf32>
    %85 = arith.subf %84, %83 : vector<8x256xf32>
    %86 = math.exp %85 : vector<8x256xf32>
    %cst_57 = arith.constant 1.000000e+00 : f32
    %87 = vector.broadcast %cst_57 : f32 to vector<8x256xf32>
    %88 = arith.addf %87, %86 : vector<8x256xf32>
    %89 = tpu.reciprocal %88 : vector<8x256xf32> -> vector<8x256xf32>
    %90 = vector.broadcast %68 : vector<8x1xf32> to vector<8x256xf32>
    %91 = arith.mulf %90, %89 : vector<8x256xf32>
    %92 = arith.addf %56, %91 : vector<8x256xf32>
    %93 = vector.broadcast %6 : vector<8x1xf32> to vector<8x256xf32>
    %94 = arith.mulf %92, %93 : vector<8x256xf32>
    %95 = vector.broadcast %7 : vector<8x1xf32> to vector<8x256xf32>
    %96 = arith.addf %94, %95 : vector<8x256xf32>
    %cst_58 = arith.constant 0.000000e+00 : f32
    %97 = vector.broadcast %cst_58 : f32 to vector<8x256xf32>
    %98 = arith.maximumf %96, %97 : vector<8x256xf32>
    %c0_59 = arith.constant 0 : index
    %c0_60 = arith.constant 0 : index
    %99 = vector.load %arg10[%c0_59, %c0_60] : memref<32x8xbf16, #tpu.memory_space<vmem>>, vector<32x8xbf16>
    %100 = arith.truncf %98 : vector<8x256xf32> to vector<8x256xbf16>
    %cst_61 = arith.constant dense<0.000000e+00> : vector<32x256xf32>
    %101 = tpu.matmul %99, %100, %cst_61 {dimension_numbers = #tpu.dot_dimension_numbers<[1], [0], [0], [1], [0, 0, 1, 1], [], []>} : vector<32x8xbf16>, vector<8x256xbf16>, vector<32x256xf32> -> vector<32x256xf32>
    %102 = vector.broadcast %8 : vector<32x1xf32> to vector<32x256xf32>
    %103 = arith.mulf %101, %102 : vector<32x256xf32>
    %104 = vector.broadcast %9 : vector<32x1xf32> to vector<32x256xf32>
    %105 = arith.addf %103, %104 : vector<32x256xf32>
    %106 = arith.addf %105, %11 : vector<32x256xf32>
    %cst_62 = arith.constant 0.000000e+00 : f32
    %107 = vector.broadcast %cst_62 : f32 to vector<32x256xf32>
    %108 = arith.maximumf %106, %107 : vector<32x256xf32>
    %c0_63 = arith.constant 0 : index
    %c0_64 = arith.constant 0 : index
    %c0_65 = arith.constant 0 : index
    %109 = vector.load %arg13[%c0_63, %c0_64, %c0_65] : memref<1x32x256xf32, #tpu.memory_space<vmem>>, vector<1x32x256xf32>
    %110 = vector.shape_cast %109 : vector<1x32x256xf32> to vector<32x256xf32>
    %111 = vector.shape_cast %108 : vector<32x256xf32> to vector<1x32x256xf32>
    tpu.vector_store %arg13[%c0_63, %c0_64, %c0_65], %111 {strides = array<i32>} : memref<1x32x256xf32, #tpu.memory_space<vmem>>, vector<1x32x256xf32>,
    return
  }
  func.func @transform_0(%arg0: i32) -> (i32, i32, i32) {
    %c0_i32 = arith.constant 0 : i32
    %c0_i32_0 = arith.constant 0 : i32
    %c0_i32_1 = arith.constant 0 : i32
    return %arg0, %c0_i32, %c0_i32_0 : i32, i32, i32
  }
  func.func @transform_1(%arg0: i32) -> (i32, i32) {
    %c0_i32 = arith.constant 0 : i32
    %c0_i32_0 = arith.constant 0 : i32
    %c0_i32_1 = arith.constant 0 : i32
    return %c0_i32, %c0_i32_0 : i32, i32
  }
  func.func @transform_2(%arg0: i32) -> (i32, i32) {
    %c0_i32 = arith.constant 0 : i32
    %c0_i32_0 = arith.constant 0 : i32
    %c0_i32_1 = arith.constant 0 : i32
    return %c0_i32, %c0_i32_0 : i32, i32
  }
  func.func @transform_3(%arg0: i32) -> (i32, i32) {
    %c0_i32 = arith.constant 0 : i32
    %c0_i32_0 = arith.constant 0 : i32
    %c0_i32_1 = arith.constant 0 : i32
    return %c0_i32, %c0_i32_0 : i32, i32
  }
  func.func @transform_4(%arg0: i32) -> (i32, i32) {
    %c0_i32 = arith.constant 0 : i32
    %c0_i32_0 = arith.constant 0 : i32
    %c0_i32_1 = arith.constant 0 : i32
    return %c0_i32, %c0_i32_0 : i32, i32
  }
  func.func @transform_5(%arg0: i32) -> (i32, i32) {
    %c0_i32 = arith.constant 0 : i32
    %c0_i32_0 = arith.constant 0 : i32
    %c0_i32_1 = arith.constant 0 : i32
    return %c0_i32, %c0_i32_0 : i32, i32
  }
  func.func @transform_6(%arg0: i32) -> (i32, i32) {
    %c0_i32 = arith.constant 0 : i32
    %c0_i32_0 = arith.constant 0 : i32
    %c0_i32_1 = arith.constant 0 : i32
    return %c0_i32, %c0_i32_0 : i32, i32
  }
  func.func @transform_7(%arg0: i32) -> (i32, i32) {
    %c0_i32 = arith.constant 0 : i32
    %c0_i32_0 = arith.constant 0 : i32
    %c0_i32_1 = arith.constant 0 : i32
    return %c0_i32, %c0_i32_0 : i32, i32
  }
  func.func @transform_8(%arg0: i32) -> (i32, i32) {
    %c0_i32 = arith.constant 0 : i32
    %c0_i32_0 = arith.constant 0 : i32
    %c0_i32_1 = arith.constant 0 : i32
    return %c0_i32, %c0_i32_0 : i32, i32
  }
  func.func @transform_9(%arg0: i32) -> (i32, i32) {
    %c0_i32 = arith.constant 0 : i32
    %c0_i32_0 = arith.constant 0 : i32
    %c0_i32_1 = arith.constant 0 : i32
    return %c0_i32, %c0_i32_0 : i32, i32
  }
  func.func @transform_10(%arg0: i32) -> (i32, i32) {
    %c0_i32 = arith.constant 0 : i32
    %c0_i32_0 = arith.constant 0 : i32
    %c0_i32_1 = arith.constant 0 : i32
    return %c0_i32, %c0_i32_0 : i32, i32
  }
  func.func @transform_11(%arg0: i32) -> (i32, i32) {
    %c0_i32 = arith.constant 0 : i32
    %c0_i32_0 = arith.constant 0 : i32
    %c0_i32_1 = arith.constant 0 : i32
    return %c0_i32, %c0_i32_0 : i32, i32
  }
  func.func @transform_12(%arg0: i32) -> (i32, i32, i32) {
    %c0_i32 = arith.constant 0 : i32
    %c0_i32_0 = arith.constant 0 : i32
    %c0_i32_1 = arith.constant 0 : i32
    return %arg0, %c0_i32, %c0_i32_0 : i32, i32, i32
  }
}

</mosaic_0001>

<llo_original>
// kernel: pixel_aware_bottleneck_forward.1
$region0: #{pixel_aware_bottleneck_forward.1}
  #allocation0 [shape = 'u32[]', space=smem, size = 0x4, offset = 0x4, fixed_abs, tag = 'smem constant byte address 0x4 - core index']
  #allocation1 [shape = 'u32[144,128]{1,0:T(1,128)}', space=vmem, size = 0x12000, scoped, tag = 'internal scratch']
  %s0 = inlined_call_operand.vmem [shape: f32[2,32,256], index: 0, kind: input, shape index: {}]
  %s1 = inlined_call_operand.vmem [shape: bf16[8,32], index: 1, kind: input, shape index: {}]
  %s2 = inlined_call_operand.vmem [shape: bf16[8,72], index: 2, kind: input, shape index: {}]
  %s3 = inlined_call_operand.vmem [shape: f32[9,256], index: 3, kind: input, shape index: {}]
  %s4 = inlined_call_operand.vmem [shape: f32[8,32], index: 4, kind: input, shape index: {}]
  %s5 = inlined_call_operand.vmem [shape: f32[8,8], index: 5, kind: input, shape index: {}]
  %s6 = inlined_call_operand.vmem [shape: f32[8,8], index: 6, kind: input, shape index: {}]
  %s7 = inlined_call_operand.vmem [shape: bf16[8,8], index: 7, kind: input, shape index: {}]
  %s8 = inlined_call_operand.vmem [shape: bf16[8,8], index: 8, kind: input, shape index: {}]
  %s9 = inlined_call_operand.vmem [shape: bf16[32,8], index: 9, kind: input, shape index: {}]
  %s10 = inlined_call_operand.vmem [shape: f32[8,8], index: 10, kind: input, shape index: {}]
  %s11 = inlined_call_operand.vmem [shape: f32[32,2], index: 11, kind: input, shape index: {}]
  %s12 = inlined_call_operand.vmem [shape: f32[2,32,256], index: 12, kind: output, shape index: {}]
  %s13 = sld [smem:[#allocation0]]
  $region81: #{pixel_aware_bottleneck_forward.1} parent=0
    _
  %s15 = ssub.s32 1, %s13
  %s16 = scalar_select 0, %s15, %s13
  loop: start=0, step=1, limit=4
  $region2: #{pixel_aware_bottleneck_forward.1} parent=0 // loop_pre_header
    _
  $region3: #{pixel_aware_bottleneck_forward.1} parent=0 // loop_header
    %s18 = sphi 0, %s22
    %p19 = scmp.ge.s32.totalorder %s18, 4
    %s28 = sphi 0, %s30
    %s31 = sphi 0, %s28
    %s32 = sphi 0, %s31
    %s48 = sphi 0, %s32
    %s52 = sphi 0, %s52
    %s54 = sphi 0, %s52
    %s55 = sphi 0, %s54
    %s69 = sphi 0, %s55
    %s73 = sphi 0, %s73
    %s75 = sphi 0, %s73
    %s76 = sphi 0, %s75
    %s90 = sphi 0, %s76
    %s94 = sphi 0, %s94
    %s96 = sphi 0, %s94
    %s97 = sphi 0, %s96
    %s111 = sphi 0, %s97
    %s115 = sphi 0, %s115
    %s117 = sphi 0, %s115
    %s118 = sphi 0, %s117
    %s132 = sphi 0, %s118
    %s136 = sphi 0, %s136
    %s138 = sphi 0, %s136
    %s139 = sphi 0, %s138
    %s153 = sphi 0, %s139
    %s157 = sphi 0, %s157
    %s159 = sphi 0, %s157
    %s160 = sphi 0, %s159
    %s174 = sphi 0, %s160
    %s178 = sphi 0, %s178
    %s180 = sphi 0, %s178
    %s181 = sphi 0, %s180
    %s195 = sphi 0, %s181
    %s199 = sphi 0, %s199
    %s201 = sphi 0, %s199
    %s202 = sphi 0, %s201
    %s216 = sphi 0, %s202
    %s220 = sphi 0, %s220
    %s222 = sphi 0, %s220
    %s223 = sphi 0, %s222
    %s237 = sphi 0, %s223
    %s241 = sphi 0, %s241
    %s243 = sphi 0, %s241
    %s244 = sphi 0, %s243
    %s258 = sphi 0, %s244
    %s262 = sphi 0, %s262
    %s264 = sphi 0, %s262
    %s265 = sphi 0, %s264
    %s279 = sphi 0, %s265
    %s285 = sphi 0, %s287
    %s288 = sphi 0, %s285
    %s289 = sphi 0, %s288
    %s305 = sphi 0, %s289
  $region4: #{pixel_aware_bottleneck_forward.1} parent=0 // loop_header_branch
    %21 = sbr.rel (%p19) target = $region8
  $region5: #{pixel_aware_bottleneck_forward.1} parent=0 // loop_body
    %s23 = ssub.s32 %s18, 1
    %s24 = ssub.s32 %s18, 2
    %s25 = sadd.s32 %s18, 1
    %s26 = ssub.s32 %s18, %s25
    %p27 = scmp.eq.s32.totalorder %s26, 0
    %s29 = sadd.s32 %s28, 1
    %s30 = scalar_select %p27, %s28, %s29
    %p33 = pneg %p27
    %p34 = scmp.eq.s32.totalorder %s18, 1
    %p35 = por %p33, %p34
    %p36 = scmp.ne.s32.totalorder %s28, %s31
    %p37 = scmp.eq.s32.totalorder %s18, 0
    %p38 = por %p36, %p37
    %p39 = scmp.ne.s32.totalorder %s28, %s31
    %p40 = scmp.eq.s32.totalorder %s23, 1
    %p41 = por %p39, %p40
    %p42 = scmp.ne.s32.totalorder %s31, %s32
    %p43 = scmp.eq.s32.totalorder %s23, 0
    %p44 = por %p42, %p43
    %p45 = scmp.ne.s32.totalorder %s31, %s32
    %p46 = scmp.eq.s32.totalorder %s24, 1
    %p47 = por %p45, %p46
    %p49 = scmp.ne.s32.totalorder %s32, %s48
    %p50 = scmp.eq.s32.totalorder %s24, 0
    %p51 = por %p49, %p50
    %s53 = sadd.s32 %s52, 1
    %p56 = scmp.eq.s32.totalorder %s18, 1
    %p57 = scmp.ne.s32.totalorder %s52, %s54
    %p58 = scmp.eq.s32.totalorder %s18, 0
    %p59 = por %p57, %p58
    %p60 = scmp.ne.s32.totalorder %s52, %s54
    %p61 = scmp.eq.s32.totalorder %s23, 1
    %p62 = por %p60, %p61
    %p63 = scmp.ne.s32.totalorder %s54, %s55
    %p64 = scmp.eq.s32.totalorder %s23, 0
    %p65 = por %p63, %p64
    %p66 = scmp.ne.s32.totalorder %s54, %s55
    %p67 = scmp.eq.s32.totalorder %s24, 1
    %p68 = por %p66, %p67
    %p70 = scmp.ne.s32.totalorder %s55, %s69
    %p71 = scmp.eq.s32.totalorder %s24, 0
    %p72 = por %p70, %p71
    %s74 = sadd.s32 %s73, 1
    %p77 = scmp.eq.s32.totalorder %s18, 1
    %p78 = scmp.ne.s32.totalorder %s73, %s75
    %p79 = scmp.eq.s32.totalorder %s18, 0
    %p80 = por %p78, %p79
    %p81 = scmp.ne.s32.totalorder %s73, %s75
    %p82 = scmp.eq.s32.totalorder %s23, 1
    %p83 = por %p81, %p82
    %p84 = scmp.ne.s32.totalorder %s75, %s76
    %p85 = scmp.eq.s32.totalorder %s23, 0
    %p86 = por %p84, %p85
    %p87 = scmp.ne.s32.totalorder %s75, %s76
    %p88 = scmp.eq.s32.totalorder %s24, 1
    %p89 = por %p87, %p88
    %p91 = scmp.ne.s32.totalorder %s76, %s90
    %p92 = scmp.eq.s32.totalorder %s24, 0
    %p93 = por %p91, %p92
    %s95 = sadd.s32 %s94, 1
    %p98 = scmp.eq.s32.totalorder %s18, 1
    %p99 = scmp.ne.s32.totalorder %s94, %s96
    %p100 = scmp.eq.s32.totalorder %s18, 0
    %p101 = por %p99, %p100
    %p102 = scmp.ne.s32.totalorder %s94, %s96
    %p103 = scmp.eq.s32.totalorder %s23, 1
    %p104 = por %p102, %p103
    %p105 = scmp.ne.s32.totalorder %s96, %s97
    %p106 = scmp.eq.s32.totalorder %s23, 0
    %p107 = por %p105, %p106
    %p108 = scmp.ne.s32.totalorder %s96, %s97
    %p109 = scmp.eq.s32.totalorder %s24, 1
    %p110 = por %p108, %p109
    %p112 = scmp.ne.s32.totalorder %s97, %s111
    %p113 = scmp.eq.s32.totalorder %s24, 0
    %p114 = por %p112, %p113
    %s116 = sadd.s32 %s115, 1
    %p119 = scmp.eq.s32.totalorder %s18, 1
    %p120 = scmp.ne.s32.totalorder %s115, %s117
    %p121 = scmp.eq.s32.totalorder %s18, 0
    %p122 = por %p120, %p121
    %p123 = scmp.ne.s32.totalorder %s115, %s117
    %p124 = scmp.eq.s32.totalorder %s23, 1
    %p125 = por %p123, %p124
    %p126 = scmp.ne.s32.totalorder %s117, %s118
    %p127 = scmp.eq.s32.totalorder %s23, 0
    %p128 = por %p126, %p127
    %p129 = scmp.ne.s32.totalorder %s117, %s118
    %p130 = scmp.eq.s32.totalorder %s24, 1
    %p131 = por %p129, %p130
    %p133 = scmp.ne.s32.totalorder %s118, %s132
    %p134 = scmp.eq.s32.totalorder %s24, 0
    %p135 = por %p133, %p134
    %s137 = sadd.s32 %s136, 1
    %p140 = scmp.eq.s32.totalorder %s18, 1
    %p141 = scmp.ne.s32.totalorder %s136, %s138
    %p142 = scmp.eq.s32.totalorder %s18, 0
    %p143 = por %p141, %p142
    %p144 = scmp.ne.s32.totalorder %s136, %s138
    %p145 = scmp.eq.s32.totalorder %s23, 1
    %p146 = por %p144, %p145
    %p147 = scmp.ne.s32.totalorder %s138, %s139
    %p148 = scmp.eq.s32.totalorder %s23, 0
    %p149 = por %p147, %p148
    %p150 = scmp.ne.s32.totalorder %s138, %s139
    %p151 = scmp.eq.s32.totalorder %s24, 1
    %p152 = por %p150, %p151
    %p154 = scmp.ne.s32.totalorder %s139, %s153
    %p155 = scmp.eq.s32.totalorder %s24, 0
    %p156 = por %p154, %p155
    %s158 = sadd.s32 %s157, 1
    %p161 = scmp.eq.s32.totalorder %s18, 1
    %p162 = scmp.ne.s32.totalorder %s157, %s159
    %p163 = scmp.eq.s32.totalorder %s18, 0
    %p164 = por %p162, %p163
    %p165 = scmp.ne.s32.totalorder %s157, %s159
    %p166 = scmp.eq.s32.totalorder %s23, 1
    %p167 = por %p165, %p166
    %p168 = scmp.ne.s32.totalorder %s159, %s160
    %p169 = scmp.eq.s32.totalorder %s23, 0
    %p170 = por %p168, %p169
    %p171 = scmp.ne.s32.totalorder %s159, %s160
    %p172 = scmp.eq.s32.totalorder %s24, 1
    %p173 = por %p171, %p172
    %p175 = scmp.ne.s32.totalorder %s160, %s174
    %p176 = scmp.eq.s32.totalorder %s24, 0
    %p177 = por %p175, %p176
    %s179 = sadd.s32 %s178, 1
    %p182 = scmp.eq.s32.totalorder %s18, 1
    %p183 = scmp.ne.s32.totalorder %s178, %s180
    %p184 = scmp.eq.s32.totalorder %s18, 0
    %p185 = por %p183, %p184
    %p186 = scmp.ne.s32.totalorder %s178, %s180
    %p187 = scmp.eq.s32.totalorder %s23, 1
    %p188 = por %p186, %p187
    %p189 = scmp.ne.s32.totalorder %s180, %s181
    %p190 = scmp.eq.s32.totalorder %s23, 0
    %p191 = por %p189, %p190
    %p192 = scmp.ne.s32.totalorder %s180, %s181
    %p193 = scmp.eq.s32.totalorder %s24, 1
    %p194 = por %p192, %p193
    %p196 = scmp.ne.s32.totalorder %s181, %s195
    %p197 = scmp.eq.s32.totalorder %s24, 0
    %p198 = por %p196, %p197
    %s200 = sadd.s32 %s199, 1
    %p203 = scmp.eq.s32.totalorder %s18, 1
    %p204 = scmp.ne.s32.totalorder %s199, %s201
    %p205 = scmp.eq.s32.totalorder %s18, 0
    %p206 = por %p204, %p205
    %p207 = scmp.ne.s32.totalorder %s199, %s201
    %p208 = scmp.eq.s32.totalorder %s23, 1
    %p209 = por %p207, %p208
    %p210 = scmp.ne.s32.totalorder %s201, %s202
    %p211 = scmp.eq.s32.totalorder %s23, 0
    %p212 = por %p210, %p211
    %p213 = scmp.ne.s32.totalorder %s201, %s202
    %p214 = scmp.eq.s32.totalorder %s24, 1
    %p215 = por %p213, %p214
    %p217 = scmp.ne.s32.totalorder %s202, %s216
    %p218 = scmp.eq.s32.totalorder %s24, 0
    %p219 = por %p217, %p218
    %s221 = sadd.s32 %s220, 1
    %p224 = scmp.eq.s32.totalorder %s18, 1
    %p225 = scmp.ne.s32.totalorder %s220, %s222
    %p226 = scmp.eq.s32.totalorder %s18, 0
    %p227 = por %p225, %p226
    %p228 = scmp.ne.s32.totalorder %s220, %s222
    %p229 = scmp.eq.s32.totalorder %s23, 1
    %p230 = por %p228, %p229
    %p231 = scmp.ne.s32.totalorder %s222, %s223
    %p232 = scmp.eq.s32.totalorder %s23, 0
    %p233 = por %p231, %p232
    %p234 = scmp.ne.s32.totalorder %s222, %s223
    %p235 = scmp.eq.s32.totalorder %s24, 1
    %p236 = por %p234, %p235
    %p238 = scmp.ne.s32.totalorder %s223, %s237
    %p239 = scmp.eq.s32.totalorder %s24, 0
    %p240 = por %p238, %p239
    %s242 = sadd.s32 %s241, 1
    %p245 = scmp.eq.s32.totalorder %s18, 1
    %p246 = scmp.ne.s32.totalorder %s241, %s243
    %p247 = scmp.eq.s32.totalorder %s18, 0
    %p248 = por %p246, %p247
    %p249 = scmp.ne.s32.totalorder %s241, %s243
    %p250 = scmp.eq.s32.totalorder %s23, 1
    %p251 = por %p249, %p250
    %p252 = scmp.ne.s32.totalorder %s243, %s244
    %p253 = scmp.eq.s32.totalorder %s23, 0
    %p254 = por %p252, %p253
    %p255 = scmp.ne.s32.totalorder %s243, %s244
    %p256 = scmp.eq.s32.totalorder %s24, 1
    %p257 = por %p255, %p256
    %p259 = scmp.ne.s32.totalorder %s244, %s258
    %p260 = scmp.eq.s32.totalorder %s24, 0
    %p261 = por %p259, %p260
    %s263 = sadd.s32 %s262, 1
    %p266 = scmp.eq.s32.totalorder %s18, 1
    %p267 = scmp.ne.s32.totalorder %s262, %s264
    %p268 = scmp.eq.s32.totalorder %s18, 0
    %p269 = por %p267, %p268
    %p270 = scmp.ne.s32.totalorder %s262, %s264
    %p271 = scmp.eq.s32.totalorder %s23, 1
    %p272 = por %p270, %p271
    %p273 = scmp.ne.s32.totalorder %s264, %s265
    %p274 = scmp.eq.s32.totalorder %s23, 0
    %p275 = por %p273, %p274
    %p276 = scmp.ne.s32.totalorder %s264, %s265
    %p277 = scmp.eq.s32.totalorder %s24, 1
    %p278 = por %p276, %p277
    %p280 = scmp.ne.s32.totalorder %s265, %s279
    %p281 = scmp.eq.s32.totalorder %s24, 0
    %p282 = por %p280, %p281
    %s283 = ssub.s32 %s18, %s25
    %p284 = scmp.eq.s32.totalorder %s283, 0
    %s286 = sadd.s32 %s285, 1
    %s287 = scalar_select %p284, %s285, %s286
    %p290 = pneg %p284
    %p291 = scmp.eq.s32.totalorder %s18, 1
    %p292 = por %p290, %p291
    %p293 = scmp.ne.s32.totalorder %s285, %s288
    %p294 = scmp.eq.s32.totalorder %s18, 0
    %p295 = por %p293, %p294
    %p296 = scmp.ne.s32.totalorder %s285, %s288
    %p297 = scmp.eq.s32.totalorder %s23, 1
    %p298 = por %p296, %p297
    %p299 = scmp.ne.s32.totalorder %s288, %s289
    %p300 = scmp.eq.s32.totalorder %s23, 0
    %p301 = por %p299, %p300
    %p302 = scmp.ne.s32.totalorder %s288, %s289
    %p303 = scmp.eq.s32.totalorder %s24, 1
    %p304 = por %p302, %p303
    %p306 = scmp.ne.s32.totalorder %s289, %s305
    %p307 = scmp.eq.s32.totalorder %s24, 0
    %p308 = por %p306, %p307
    %p309 = scmp.le.s32.totalorder 1, %s18
    %p310 = scmp.lt.s32.totalorder %s18, 3
    %p311 = pnand %p309, %p310
    %p312 = pneg %p311
    // Predicated region
    $region9: #{pixel_aware_bottleneck_forward.1} parent=5 // pred_check
      _
    $region10: #{pixel_aware_bottleneck_forward.1} parent=5 // pred_check_branch
      %314 = sbr.rel (%p311) target = $region12
    $region11: #{pixel_aware_bottleneck_forward.1} parent=5 // pred_region
      %s315 = ssub.s32 %s18, 1
      // Predicated region
      $region13: #{pixel_aware_bottleneck_forward.1} parent=11 // pred_check
        %p316 = pneg %p65
      $region14: #{pixel_aware_bottleneck_forward.1} parent=11 // pred_check_branch
        %318 = sbr.rel (%p316) target = $region16
      $region15: #{pixel_aware_bottleneck_forward.1} parent=11 // pred_region
        _
      $region16: #{pixel_aware_bottleneck_forward.1} parent=11 // pred_fallthru
        _
      // Predicated region
      $region17: #{pixel_aware_bottleneck_forward.1} parent=11 // pred_check
        %p319 = pneg %p86
      $region18: #{pixel_aware_bottleneck_forward.1} parent=11 // pred_check_branch
        %321 = sbr.rel (%p319) target = $region20
      $region19: #{pixel_aware_bottleneck_forward.1} parent=11 // pred_region
        _
      $region20: #{pixel_aware_bottleneck_forward.1} parent=11 // pred_fallthru
        _
      // Predicated region
      $region21: #{pixel_aware_bottleneck_forward.1} parent=11 // pred_check
        %p322 = pneg %p107
      $region22: #{pixel_aware_bottleneck_forward.1} parent=11 // pred_check_branch
        %324 = sbr.rel (%p322) target = $region24
      $region23: #{pixel_aware_bottleneck_forward.1} parent=11 // pred_region
        _
      $region24: #{pixel_aware_bottleneck_forward.1} parent=11 // pred_fallthru
        _
      // Predicated region
      $region25: #{pixel_aware_bottleneck_forward.1} parent=11 // pred_check
        %p325 = pneg %p128
      $region26: #{pixel_aware_bottleneck_forward.1} parent=11 // pred_check_branch
        %327 = sbr.rel (%p325) target = $region28
      $region27: #{pixel_aware_bottleneck_forward.1} parent=11 // pred_region
        _
      $region28: #{pixel_aware_bottleneck_forward.1} parent=11 // pred_fallthru
        _
      // Predicated region
      $region29: #{pixel_aware_bottleneck_forward.1} parent=11 // pred_check
        %p328 = pneg %p149
      $region30: #{pixel_aware_bottleneck_forward.1} parent=11 // pred_check_branch
        %330 = sbr.rel (%p328) target = $region32
      $region31: #{pixel_aware_bottleneck_forward.1} parent=11 // pred_region
        _
      $region32: #{pixel_aware_bottleneck_forward.1} parent=11 // pred_fallthru
        _
      // Predicated region
      $region33: #{pixel_aware_bottleneck_forward.1} parent=11 // pred_check
        %p331 = pneg %p170
      $region34: #{pixel_aware_bottleneck_forward.1} parent=11 // pred_check_branch
        %333 = sbr.rel (%p331) target = $region36
      $region35: #{pixel_aware_bottleneck_forward.1} parent=11 // pred_region
        _
      $region36: #{pixel_aware_bottleneck_forward.1} parent=11 // pred_fallthru
        _
      // Predicated region
      $region37: #{pixel_aware_bottleneck_forward.1} parent=11 // pred_check
        %p334 = pneg %p191
      $region38: #{pixel_aware_bottleneck_forward.1} parent=11 // pred_check_branch
        %336 = sbr.rel (%p334) target = $region40
      $region39: #{pixel_aware_bottleneck_forward.1} parent=11 // pred_region
        _
      $region40: #{pixel_aware_bottleneck_forward.1} parent=11 // pred_fallthru
        _
      // Predicated region
      $region41: #{pixel_aware_bottleneck_forward.1} parent=11 // pred_check
        %p337 = pneg %p212
      $region42: #{pixel_aware_bottleneck_forward.1} parent=11 // pred_check_branch
        %339 = sbr.rel (%p337) target = $region44
      $region43: #{pixel_aware_bottleneck_forward.1} parent=11 // pred_region
        _
      $region44: #{pixel_aware_bottleneck_forward.1} parent=11 // pred_fallthru
        _
      // Predicated region
      $region45: #{pixel_aware_bottleneck_forward.1} parent=11 // pred_check
        %p340 = pneg %p233
      $region46: #{pixel_aware_bottleneck_forward.1} parent=11 // pred_check_branch
        %342 = sbr.rel (%p340) target = $region48
      $region47: #{pixel_aware_bottleneck_forward.1} parent=11 // pred_region
        _
      $region48: #{pixel_aware_bottleneck_forward.1} parent=11 // pred_fallthru
        _
      // Predicated region
      $region49: #{pixel_aware_bottleneck_forward.1} parent=11 // pred_check
        %p343 = pneg %p254
      $region50: #{pixel_aware_bottleneck_forward.1} parent=11 // pred_check_branch
        %345 = sbr.rel (%p343) target = $region52
      $region51: #{pixel_aware_bottleneck_forward.1} parent=11 // pred_region
        _
      $region52: #{pixel_aware_bottleneck_forward.1} parent=11 // pred_fallthru
        _
      // Predicated region
      $region53: #{pixel_aware_bottleneck_forward.1} parent=11 // pred_check
        %p346 = pneg %p275
      $region54: #{pixel_aware_bottleneck_forward.1} parent=11 // pred_check_branch
        %348 = sbr.rel (%p346) target = $region56
      $region55: #{pixel_aware_bottleneck_forward.1} parent=11 // pred_region
        _
      $region56: #{pixel_aware_bottleneck_forward.1} parent=11 // pred_fallthru
        _
    $region12: #{pixel_aware_bottleneck_forward.1} parent=5 // pred_fallthru
      _
    %p349 = scmp.lt.s32.totalorder %s18, 2
    // Predicated region
    $region57: #{pixel_aware_bottleneck_forward.1} parent=5 // pred_check
      %p350 = pneg %p349
    $region58: #{pixel_aware_bottleneck_forward.1} parent=5 // pred_check_branch
      %352 = sbr.rel (%p350) target = $region60
    $region59: #{pixel_aware_bottleneck_forward.1} parent=5 // pred_region
      // Predicated region
      $region61: #{pixel_aware_bottleneck_forward.1} parent=59 // pred_check
        %p353 = pneg %p38
      $region62: #{pixel_aware_bottleneck_forward.1} parent=59 // pred_check_branch
        %355 = sbr.rel (%p353) target = $region64
      $region63: #{pixel_aware_bottleneck_forward.1} parent=59 // pred_region
        %p356 = scmp.lt.s32.totalorder %s18, 1
        %s357 = scalar_select %p356, %s18, 1
        %s358 = smul.addr %s357, 8
        %s359 = smul.addr %s358, 8
        %s360 = scalar_lea.vmem %s0, %s359
      $region64: #{pixel_aware_bottleneck_forward.1} parent=59 // pred_fallthru
        _
    $region60: #{pixel_aware_bottleneck_forward.1} parent=5 // pred_fallthru
      _
    %p361 = scmp.le.s32.totalorder 1, %s18
    %p362 = scmp.lt.s32.totalorder %s18, 3
    %p363 = pnand %p361, %p362
    %p364 = pneg %p363
    // Predicated region
    $region65: #{pixel_aware_bottleneck_forward.1} parent=5 // pred_check
      _
    $region66: #{pixel_aware_bottleneck_forward.1} parent=5 // pred_check_branch
      %366 = sbr.rel (%p363) target = $region68
    $region67: #{pixel_aware_bottleneck_forward.1} parent=5 // pred_region
      %s367 = ssub.s32 %s18, 1
      %p368 = scmp.lt.s32.totalorder %s23, 1
      %s369 = scalar_select %p368, %s23, 1
      %s370 = smul.addr %s369, 8
      %s371 = smul.addr %s370, 8
      %s372 = scalar_lea.vmem %s0, %s371
      %p373 = pneg %p44
      %p374 = pneg %p41
      %p375 = pneg %p65
      %p376 = pneg %p62
      %p377 = pneg %p86
      %p378 = pneg %p83
      %p379 = pneg %p107
      %p380 = pneg %p104
      %p381 = pneg %p128
      %p382 = pneg %p125
      %p383 = pneg %p149
      %p384 = pneg %p146
      %p385 = pneg %p170
      %p386 = pneg %p167
      %p387 = pneg %p191
      %p388 = pneg %p188
      %p389 = pneg %p212
      %p390 = pneg %p209
      %p391 = pneg %p233
      %p392 = pneg %p230
      %p393 = pneg %p254
      %p394 = pneg %p251
      %p395 = pneg %p275
      %p396 = pneg %p272
      %p397 = pneg %p301
      %p398 = pneg %p298
      %p399 = scmp.lt.s32.totalorder %s23, 1
      %s400 = scalar_select %p399, %s23, 1
      %s401 = smul.addr %s400, 8
      %s402 = smul.addr %s401, 8
      %s403 = scalar_lea.vmem %s12, %s402
      %p404 = scmp.lt.s32.totalorder %s23, 1
      %s405 = scalar_select %p404, %s23, 1
      %s406 = smul.addr %s405, 8
      %s407 = smul.addr %s406, 8
      %s408 = scalar_lea.vmem %s0, %s407
      %p409 = scmp.lt.s32.totalorder %s23, 1
      %s410 = scalar_select %p409, %s23, 1
      %s411 = smul.addr %s410, 8
      %s412 = smul.addr %s411, 8
      %s413 = scalar_lea.vmem %s12, %s412
      %v416 = vld [vmem:[%s10] sm:$0xff]
      %v417 = vld [vmem:[%s11] sm:$0xff]
      %v418 = vld [vmem:[%s11 + $0x8] sm:$0xff]
      %v419 = vld [vmem:[%s11 + $0x10] sm:$0xff]
      %v420 = vld [vmem:[%s11 + $0x18] sm:$0xff]
      %v421 = vld [vmem:[%s408] sm:$0xff]
      %v422 = vld [vmem:[%s408 + $0x8] sm:$0xff]
      %v423 = vld [vmem:[%s408 + $0x10] sm:$0xff]
      %v424 = vld [vmem:[%s408 + $0x18] sm:$0xff]
      %v425 = vld [vmem:[%s408 + $0x20] sm:$0xff]
      %v426 = vld [vmem:[%s408 + $0x28] sm:$0xff]
      %v427 = vld [vmem:[%s408 + $0x30] sm:$0xff]
      %v428 = vld [vmem:[%s408 + $0x38] sm:$0xff]
      %v429 = vpack.c.bf16 %v423, %v421
      %v430 = vpack.c.bf16 %v424, %v422
      %v431 = vpack.c.bf16 %v427, %v425
      %v432 = vpack.c.bf16 %v428, %v426
      %v433 = vld [vmem:[%s1] sm:$0xf]
      %vm434 = vcmask 261120
      %v436 = vsel %vm434, %v433, 0
      %438 = vmatprep.subr.bf16.mxu0 %v430
      %439 = vmatpush1.bf16.msra.mxu0 %v429
      %440 = vmatprep.subr.bf16.mxu0 %v432
      %441 = vmatpush1.bf16.msra.mxu0 %v431
      %442 = vmatprep.subr.bf16.mxu0 0
      %443 = vmatpush1.bf16.msra.mxu0 0
      %444 = vmatprep.subr.bf16.mxu0 0
      %445 = vmatpush1.bf16.msra.mxu0 0
      %446 = vmatprep.subr.bf16.mxu0 0
      %447 = vmatpush1.bf16.msra.mxu0 0
      %448 = vmatprep.subr.bf16.mxu0 0
      %449 = vmatpush1.bf16.msra.mxu0 0
      %450 = vmatprep.subr.bf16.mxu0 0
      %451 = vmatpush1.bf16.msra.mxu0 0
      %452 = vmatprep.subr.bf16.mxu0 0
      %453 = vmatpush1.bf16.msra.mxu0 0
      %454 = vmatprep.subr.bf16.mxu0 0
      %455 = vmatpush1.bf16.msra.mxu0 0
      %456 = vmatprep.subr.bf16.mxu0 0
      %457 = vmatpush1.bf16.msra.mxu0 0
      %458 = vmatprep.subr.bf16.mxu0 0
      %459 = vmatpush1.bf16.msra.mxu0 0
      %460 = vmatprep.subr.bf16.mxu0 0
      %461 = vmatpush1.bf16.msra.mxu0 0
      %462 = vmatprep.subr.bf16.mxu0 0
      %463 = vmatpush1.bf16.msra.mxu0 0
      %464 = vmatprep.subr.bf16.mxu0 0
      %465 = vmatpush1.bf16.msra.mxu0 0
      %466 = vmatprep.subr.bf16.mxu0 0
      %467 = vmatpush1.bf16.msra.mxu0 0
      %468 = vmatprep.subr.bf16.mxu0 0
      %469 = vmatpush1.bf16.msra.mxu0 0
      %470 = vmatprep.mubr.bf16.mxu0 0
      %471 = vmatmul.mubr.bf16.gmra.mrb[0].mxu0 %v436
      %v472 = vpop.f32.mrb[0].mxu0
      %v473 = vadd.f32 0.0, %v472
      %v474 = vpop.f32.mrb[0].mxu0
      %v475 = vadd.f32 0.0, %v474
      %v476 = vpop.f32.mrb[0].mxu0
      %v477 = vpop.f32.mrb[0].mxu0
      %478 = vdwg.mxu0
      %480 = vset.pattern.permute.xlu0 0
      %481 = vperm.xlu0 %480, %v416
      %v482 = vpop.permute.xlu0 %481
      %v484 = vmul.f32 %v473, %v482
      %v485 = vmul.f32 %v475, %v482
      %486 = vset.pattern.permute.xlu0 1
      %487 = vperm.xlu0 %486, %v416
      %v488 = vpop.permute.xlu0 %487
      %v490 = vadd.f32 %v484, %v488
      %v491 = vadd.f32 %v485, %v488
      %v492 = vmax.f32 %v490, 0.0
      %v493 = vmax.f32 %v491, 0.0
      %494 = vrot.lane.b32.xlu0 %v492, 17
      %v495 = vpop.permute.xlu0 %494
      %496 = vrot.lane.b32.xlu0 %v493, 17
      %v497 = vpop.permute.xlu0 %496
      %v498 = vlaneseq
      %v499 = vand.u32 %v498, 127
      %vm500 = vcmp.lt.s32.totalorder %v499, 17
      %v501 = vsel %vm500, %v495, %v497
      %v502 = vsel %vm500, %v497, %v495
      %v503 = vld [vmem:[%s3] ss:$8 sm:$0x3]
      %v505 = vlaneseq
      %v506 = vshrl.u32 %v505, 7
      %v507 = vsub.s32 0, %v506
      %v508 = vrot.slane %v503, %v507
      %v509 = vlaneseq
      %v510 = vshrl.u32 %v509, 7
      %v511 = vsub.s32 1, %v510
      %v512 = vrot.slane %v503, %v511
      %v515 = vmul.f32 %v502, %v508
      %v516 = vmul.f32 %v501, %v512
      %517 = vrot.lane.b32.xlu0 %v492, 16
      %v518 = vpop.permute.xlu0 %517
      %519 = vrot.lane.b32.xlu0 %v493, 16
      %v520 = vpop.permute.xlu0 %519
      %vm521 = vcmp.lt.s32.totalorder %v499, 16
      %v522 = vsel %vm521, %v518, %v520
      %v523 = vsel %vm521, %v520, %v518
      %s524 = scalar_lea.vmem %s3, 1
      %v525 = vld [vmem:[%s524] ss:$8 sm:$0x3]
      %v527 = vlaneseq
      %v528 = vshrl.u32 %v527, 7
      %v529 = vsub.s32 0, %v528
      %v530 = vrot.slane %v525, %v529
      %v531 = vlaneseq
      %v532 = vshrl.u32 %v531, 7
      %v533 = vsub.s32 1, %v532
      %v534 = vrot.slane %v525, %v533
      %v537 = vmul.f32 %v523, %v530
      %v538 = vmul.f32 %v522, %v534
      %539 = vrot.lane.b32.xlu0 %v492, 15
      %v540 = vpop.permute.xlu0 %539
      %541 = vrot.lane.b32.xlu0 %v493, 15
      %v542 = vpop.permute.xlu0 %541
      %vm543 = vcmp.lt.s32.totalorder %v499, 15
      %v544 = vsel %vm543, %v540, %v542
      %v545 = vsel %vm543, %v542, %v540
      %s546 = scalar_lea.vmem %s3, 2
      %v547 = vld [vmem:[%s546] ss:$8 sm:$0x3]
      %v549 = vlaneseq
      %v550 = vshrl.u32 %v549, 7
      %v551 = vsub.s32 0, %v550
      %v552 = vrot.slane %v547, %v551
      %v553 = vlaneseq
      %v554 = vshrl.u32 %v553, 7
      %v555 = vsub.s32 1, %v554
      %v556 = vrot.slane %v547, %v555
      %v559 = vmul.f32 %v545, %v552
      %v560 = vmul.f32 %v544, %v556
      %561 = vrot.lane.b32.xlu0 %v492, 1
      %v562 = vpop.permute.xlu0 %561
      %563 = vrot.lane.b32.xlu0 %v493, 1
      %v564 = vpop.permute.xlu0 %563
      %vm565 = vcmp.lt.s32.totalorder %v499, 1
      %v566 = vsel %vm565, %v562, %v564
      %v567 = vsel %vm565, %v564, %v562
      %s568 = scalar_lea.vmem %s3, 3
      %v569 = vld [vmem:[%s568] ss:$8 sm:$0x3]
      %v571 = vlaneseq
      %v572 = vshrl.u32 %v571, 7
      %v573 = vsub.s32 0, %v572
      %v574 = vrot.slane %v569, %v573
      %v575 = vlaneseq
      %v576 = vshrl.u32 %v575, 7
      %v577 = vsub.s32 1, %v576
      %v578 = vrot.slane %v569, %v577
      %v581 = vmul.f32 %v567, %v574
      %v582 = vmul.f32 %v566, %v578
      %583 = vrot.lane.b32.xlu0 %v492, 127
      %v584 = vpop.permute.xlu0 %583
      %585 = vrot.lane.b32.xlu0 %v493, 127
      %v586 = vpop.permute.xlu0 %585
      %vm587 = vcmp.lt.s32.totalorder %v499, 127
      %v588 = vsel %vm587, %v584, %v586
      %v589 = vsel %vm587, %v586, %v584
      %s590 = scalar_lea.vmem %s3, 5
      %v591 = vld [vmem:[%s590] ss:$8 sm:$0x3]
      %v593 = vlaneseq
      %v594 = vshrl.u32 %v593, 7
      %v595 = vsub.s32 0, %v594
      %v596 = vrot.slane %v591, %v595
      %v597 = vlaneseq
      %v598 = vshrl.u32 %v597, 7
      %v599 = vsub.s32 1, %v598
      %v600 = vrot.slane %v591, %v599
      %v603 = vmul.f32 %v588, %v596
      %v604 = vmul.f32 %v589, %v600
      %605 = vrot.lane.b32.xlu0 %v492, 113
      %v606 = vpop.permute.xlu0 %605
      %607 = vrot.lane.b32.xlu0 %v493, 113
      %v608 = vpop.permute.xlu0 %607
      %vm609 = vcmp.lt.s32.totalorder %v499, 113
      %v610 = vsel %vm609, %v606, %v608
      %v611 = vsel %vm609, %v608, %v606
      %s612 = scalar_lea.vmem %s3, 6
      %v613 = vld [vmem:[%s612] ss:$8 sm:$0x3]
      %v615 = vlaneseq
      %v616 = vshrl.u32 %v615, 7
      %v617 = vsub.s32 0, %v616
      %v618 = vrot.slane %v613, %v617
      %v619 = vlaneseq
      %v620 = vshrl.u32 %v619, 7
      %v621 = vsub.s32 1, %v620
      %v622 = vrot.slane %v613, %v621
      %v625 = vmul.f32 %v610, %v618
      %v626 = vmul.f32 %v611, %v622
      %627 = vrot.lane.b32.xlu0 %v492, 112
      %v628 = vpop.permute.xlu0 %627
      %629 = vrot.lane.b32.xlu0 %v493, 112
      %v630 = vpop.permute.xlu0 %629
      %vm631 = vcmp.lt.s32.totalorder %v499, 112
      %v632 = vsel %vm631, %v628, %v630
      %v633 = vsel %vm631, %v630, %v628
      %s634 = scalar_lea.vmem %s3, 7
      %v635 = vld [vmem:[%s634] ss:$8 sm:$0x3]
      %v637 = vlaneseq
      %v638 = vshrl.u32 %v637, 7
      %v639 = vsub.s32 0, %v638
      %v640 = vrot.slane %v635, %v639
      %v641 = vlaneseq
      %v642 = vshrl.u32 %v641, 7
      %v643 = vsub.s32 1, %v642
      %v644 = vrot.slane %v635, %v643
      %v647 = vmul.f32 %v632, %v640
      %v648 = vmul.f32 %v633, %v644
      %649 = vrot.lane.b32.xlu0 %v492, 111
      %v650 = vpop.permute.xlu0 %649
      %651 = vrot.lane.b32.xlu0 %v493, 111
      %v652 = vpop.permute.xlu0 %651
      %vm653 = vcmp.lt.s32.totalorder %v499, 111
      %v654 = vsel %vm653, %v650, %v652
      %v655 = vsel %vm653, %v652, %v650
      %s656 = scalar_lea.vmem %s3, 16
      %v657 = vld [vmem:[%s656] ss:$8 sm:$0x3]
      %v659 = vlaneseq
      %v660 = vshrl.u32 %v659, 7
      %v661 = vsub.s32 0, %v660
      %v662 = vrot.slane %v657, %v661
      %v663 = vlaneseq
      %v664 = vshrl.u32 %v663, 7
      %v665 = vsub.s32 1, %v664
      %v666 = vrot.slane %v657, %v665
      %v669 = vmul.f32 %v654, %v662
      %v670 = vmul.f32 %v655, %v666
      %v671 = vld [vmem:[%s2] sm:$0xf]
      %v672 = vpack.c.bf16 %v537, %v515
      %v673 = vpack.c.bf16 %v538, %v516
      %v674 = vpack.c.bf16 %v581, %v559
      %v675 = vpack.c.bf16 %v582, %v560
      %v676 = vpack.c.bf16 %v603, %v492
      %v677 = vpack.c.bf16 %v604, %v493
      %v678 = vpack.c.bf16 %v647, %v625
      %v679 = vpack.c.bf16 %v648, %v626
      %v680 = vpack.c.bf16 %v669, %v669
      %v681 = vpack.c.bf16 %v670, %v670
      %vm682 = vcmask 588800
      %v684 = vsel %vm682, %v671, 0
      %vm686 = vcmask 1043456
      %v688 = vsel %vm686, %v680, 0
      %v691 = vsel %vm686, %v681, 0
      %693 = vmatprep.subr.bf16.mxu0 %v673
      %694 = vmatpush1.bf16.msra.mxu0 %v672
      %695 = vmatprep.subr.bf16.mxu0 %v675
      %696 = vmatpush1.bf16.msra.mxu0 %v674
      %697 = vmatprep.subr.bf16.mxu0 %v677
      %698 = vmatpush1.bf16.msra.mxu0 %v676
      %699 = vmatprep.subr.bf16.mxu0 %v679
      %700 = vmatpush1.bf16.msra.mxu0 %v678
      %701 = vmatprep.subr.bf16.mxu0 %v691
      %702 = vmatpush1.bf16.msra.mxu0 %v688
      %703 = vmatprep.subr.bf16.mxu0 0
      %704 = vmatpush1.bf16.msra.mxu0 0
      %705 = vmatprep.subr.bf16.mxu0 0
      %706 = vmatpush1.bf16.msra.mxu0 0
      %707 = vmatprep.subr.bf16.mxu0 0
      %708 = vmatpush1.bf16.msra.mxu0 0
      %709 = vmatprep.subr.bf16.mxu0 0
      %710 = vmatpush1.bf16.msra.mxu0 0
      %711 = vmatprep.subr.bf16.mxu0 0
      %712 = vmatpush1.bf16.msra.mxu0 0
      %713 = vmatprep.subr.bf16.mxu0 0
      %714 = vmatpush1.bf16.msra.mxu0 0
      %715 = vmatprep.subr.bf16.mxu0 0
      %716 = vmatpush1.bf16.msra.mxu0 0
      %717 = vmatprep.subr.bf16.mxu0 0
      %718 = vmatpush1.bf16.msra.mxu0 0
      %719 = vmatprep.subr.bf16.mxu0 0
      %720 = vmatpush1.bf16.msra.mxu0 0
      %721 = vmatprep.subr.bf16.mxu0 0
      %722 = vmatpush1.bf16.msra.mxu0 0
      %723 = vmatprep.subr.bf16.mxu0 0
      %724 = vmatpush1.bf16.msra.mxu0 0
      %725 = vmatprep.mubr.bf16.mxu0 0
      %726 = vmatmul.mubr.bf16.gmra.mrb[0].mxu0 %v684
      %v727 = vpop.f32.mrb[0].mxu0
      %v728 = vadd.f32 0.0, %v727
      %v729 = vpop.f32.mrb[0].mxu0
      %v730 = vadd.f32 0.0, %v729
      %v731 = vpop.f32.mrb[0].mxu0
      %v732 = vpop.f32.mrb[0].mxu0
      %733 = vdwg.mxu0
      %734 = vmatprep.subr.bf16.mxu0 0
      %735 = vmatpush1.bf16.msra.mxu0 1065369472
      %736 = vmatprep.subr.bf16.mxu0 0
      %737 = vmatpush1.bf16.msra.mxu0 1065369472
      %738 = vmatprep.subr.bf16.mxu0 0
      %739 = vmatpush1.bf16.msra.mxu0 1065369472
      %740 = vmatprep.subr.bf16.mxu0 0
      %741 = vmatpush1.bf16.msra.mxu0 1065369472
      %742 = vmatprep.subr.bf16.mxu0 0
      %743 = vmatpush1.bf16.msra.mxu0 1065369472
      %744 = vmatprep.subr.bf16.mxu0 0
      %745 = vmatpush1.bf16.msra.mxu0 1065369472
      %746 = vmatprep.subr.bf16.mxu0 0
      %747 = vmatpush1.bf16.msra.mxu0 1065369472
      %748 = vmatprep.subr.bf16.mxu0 0
      %749 = vmatpush1.bf16.msra.mxu0 1065369472
      %750 = vmatprep.subr.bf16.mxu0 0
      %751 = vmatpush1.bf16.msra.mxu0 1065369472
      %752 = vmatprep.subr.bf16.mxu0 0
      %753 = vmatpush1.bf16.msra.mxu0 1065369472
      %754 = vmatprep.subr.bf16.mxu0 0
      %755 = vmatpush1.bf16.msra.mxu0 1065369472
      %756 = vmatprep.subr.bf16.mxu0 0
      %757 = vmatpush1.bf16.msra.mxu0 1065369472
      %758 = vmatprep.subr.bf16.mxu0 0
      %759 = vmatpush1.bf16.msra.mxu0 1065369472
      %760 = vmatprep.subr.bf16.mxu0 0
      %761 = vmatpush1.bf16.msra.mxu0 1065369472
      %762 = vmatprep.subr.bf16.mxu0 0
      %763 = vmatpush1.bf16.msra.mxu0 1065369472
      %764 = vmatprep.subr.bf16.mxu0 0
      %765 = vmatpush1.bf16.msra.mxu0 1065369472
      %766 = vmatprep.mubr.bf16.mxu0 %v430
      %767 = vmatmul.mubr.bf16.gmra.mrb[0].mxu0 %v429
      %v768 = vpop.f32.mrb[0].mxu0
      %v769 = vadd.f32 0.0, %v768
      %v770 = vpop.f32.mrb[0].mxu0
      %v771 = vpop.f32.mrb[0].mxu0
      %v772 = vadd.f32 0.0, %v771
      %v773 = vpop.f32.mrb[0].mxu0
      %774 = vmatprep.mubr.bf16.mxu0 %v432
      %775 = vmatmul.mubr.bf16.gmra.mrb[0].mxu0 %v431
      %v776 = vpop.f32.mrb[0].mxu0
      %v777 = vadd.f32 0.0, %v776
      %v778 = vpop.f32.mrb[0].mxu0
      %v779 = vpop.f32.mrb[0].mxu0
      %v780 = vadd.f32 0.0, %v779
      %v781 = vpop.f32.mrb[0].mxu0
      %782 = vdwg.mxu0
      %v783 = vmul.f32 %v769, 0.00390625
      %v784 = vmul.f32 %v772, 0.00390625
      %v785 = vmul.f32 %v777, 0.00390625
      %v786 = vmul.f32 %v780, 0.00390625
      %v787 = vld [vmem:[%s4] sm:$0xff]
      %788 = vrot.lane.b32.xlu0 %v416, 126
      %v789 = vpop.permute.xlu0 %788
      %v792 = vsel %vm434, %v787, 0
      %794 = vmatprep.subr.mxu0 0.0
      %795 = vmatpush1.msra.mxu0 %v783
      %796 = vmatprep.subr.mxu0 0.0
      %797 = vmatpush1.msra.mxu0 %v784
      %798 = vmatprep.subr.mxu0 0.0
      %799 = vmatpush1.msra.mxu0 %v785
      %800 = vmatprep.subr.mxu0 0.0
      %801 = vmatpush1.msra.mxu0 %v786
      %802 = vmatprep.subr.mxu0 0.0
      %803 = vmatpush1.msra.mxu0 0.0
      %804 = vmatprep.subr.mxu0 0.0
      %805 = vmatpush1.msra.mxu0 0.0
      %806 = vmatprep.subr.mxu0 0.0
      %807 = vmatpush1.msra.mxu0 0.0
      %808 = vmatprep.subr.mxu0 0.0
      %809 = vmatpush1.msra.mxu0 0.0
      %810 = vmatprep.subr.mxu0 0.0
      %811 = vmatpush1.msra.mxu0 0.0
      %812 = vmatprep.subr.mxu0 0.0
      %813 = vmatpush1.msra.mxu0 0.0
      %814 = vmatprep.subr.mxu0 0.0
      %815 = vmatpush1.msra.mxu0 0.0
      %816 = vmatprep.subr.mxu0 0.0
      %817 = vmatpush1.msra.mxu0 0.0
      %818 = vmatprep.subr.mxu0 0.0
      %819 = vmatpush1.msra.mxu0 0.0
      %820 = vmatprep.subr.mxu0 0.0
      %821 = vmatpush1.msra.mxu0 0.0
      %822 = vmatprep.subr.mxu0 0.0
      %823 = vmatpush1.msra.mxu0 0.0
      %824 = vmatprep.subr.mxu0 0.0
      %825 = vmatpush1.msra.mxu0 0.0
      %826 = vmatprep.subr.mxu0 0.0
      %827 = vmatpush1.msra.mxu0 0.0
      %828 = vmatprep.subr.mxu0 0.0
      %829 = vmatpush1.msra.mxu0 0.0
      %830 = vmatprep.subr.mxu0 0.0
      %831 = vmatpush1.msra.mxu0 0.0
      %832 = vmatprep.subr.mxu0 0.0
      %833 = vmatpush1.msra.mxu0 0.0
      %834 = vmatprep.subr.mxu0 0.0
      %835 = vmatpush1.msra.mxu0 0.0
      %836 = vmatprep.subr.mxu0 0.0
      %837 = vmatpush1.msra.mxu0 0.0
      %838 = vmatprep.subr.mxu0 0.0
      %839 = vmatpush1.msra.mxu0 0.0
      %840 = vmatprep.subr.mxu0 0.0
      %841 = vmatpush1.msra.mxu0 0.0
      %842 = vmatprep.subr.mxu0 0.0
      %843 = vmatpush1.msra.mxu0 0.0
      %844 = vmatprep.subr.mxu0 0.0
      %845 = vmatpush1.msra.mxu0 0.0
      %846 = vmatprep.subr.mxu0 0.0
      %847 = vmatpush1.msra.mxu0 0.0
      %848 = vmatprep.subr.mxu0 0.0
      %849 = vmatpush1.msra.mxu0 0.0
      %850 = vmatprep.subr.mxu0 0.0
      %851 = vmatpush1.msra.mxu0 0.0
      %852 = vmatprep.subr.mxu0 0.0
      %853 = vmatpush1.msra.mxu0 0.0
      %854 = vmatprep.subr.mxu0 0.0
      %855 = vmatpush1.msra.mxu0 0.0
      %856 = vmatprep.subr.mxu0 0.0
      %857 = vmatpush1.msra.mxu0 0.0
      %858 = vmatprep.mubr.f32.mxu0 0.0
      %859 = vmatmul.mubr.f32.gmra.mrb[0].mxu0 %v792
      %v860 = vpop.f32.mrb[0].mxu0
      %v861 = vadd.f32 %v789, %v860
      %v862 = vpop.f32.mrb[0].mxu0
      %863 = vdwg.mxu0
      %v864 = vmax.f32 %v861, 0.0
      %v865 = vld [vmem:[%s5] sm:$0xff]
      %866 = vrot.lane.b32.xlu0 %v416, 125
      %v867 = vpop.permute.xlu0 %866
      %vm869 = vcmask 64512
      %v871 = vsel %vm869, %v865, 0
      %873 = vmatprep.subr.mxu0 0.0
      %874 = vmatpush1.msra.mxu0 %v864
      %875 = vmatprep.subr.mxu0 0.0
      %876 = vmatpush1.msra.mxu0 0.0
      %877 = vmatprep.subr.mxu0 0.0
      %878 = vmatpush1.msra.mxu0 0.0
      %879 = vmatprep.subr.mxu0 0.0
      %880 = vmatpush1.msra.mxu0 0.0
      %881 = vmatprep.subr.mxu0 0.0
      %882 = vmatpush1.msra.mxu0 0.0
      %883 = vmatprep.subr.mxu0 0.0
      %884 = vmatpush1.msra.mxu0 0.0
      %885 = vmatprep.subr.mxu0 0.0
      %886 = vmatpush1.msra.mxu0 0.0
      %887 = vmatprep.subr.mxu0 0.0
      %888 = vmatpush1.msra.mxu0 0.0
      %889 = vmatprep.subr.mxu0 0.0
      %890 = vmatpush1.msra.mxu0 0.0
      %891 = vmatprep.subr.mxu0 0.0
      %892 = vmatpush1.msra.mxu0 0.0
      %893 = vmatprep.subr.mxu0 0.0
      %894 = vmatpush1.msra.mxu0 0.0
      %895 = vmatprep.subr.mxu0 0.0
      %896 = vmatpush1.msra.mxu0 0.0
      %897 = vmatprep.subr.mxu0 0.0
      %898 = vmatpush1.msra.mxu0 0.0
      %899 = vmatprep.subr.mxu0 0.0
      %900 = vmatpush1.msra.mxu0 0.0
      %901 = vmatprep.subr.mxu0 0.0
      %902 = vmatpush1.msra.mxu0 0.0
      %903 = vmatprep.subr.mxu0 0.0
      %904 = vmatpush1.msra.mxu0 0.0
      %905 = vmatprep.subr.mxu0 0.0
      %906 = vmatpush1.msra.mxu0 0.0
      %907 = vmatprep.subr.mxu0 0.0
      %908 = vmatpush1.msra.mxu0 0.0
      %909 = vmatprep.subr.mxu0 0.0
      %910 = vmatpush1.msra.mxu0 0.0
      %911 = vmatprep.subr.mxu0 0.0
      %912 = vmatpush1.msra.mxu0 0.0
      %913 = vmatprep.subr.mxu0 0.0
      %914 = vmatpush1.msra.mxu0 0.0
      %915 = vmatprep.subr.mxu0 0.0
      %916 = vmatpush1.msra.mxu0 0.0
      %917 = vmatprep.subr.mxu0 0.0
      %918 = vmatpush1.msra.mxu0 0.0
      %919 = vmatprep.subr.mxu0 0.0
      %920 = vmatpush1.msra.mxu0 0.0
      %921 = vmatprep.subr.mxu0 0.0
      %922 = vmatpush1.msra.mxu0 0.0
      %923 = vmatprep.subr.mxu0 0.0
      %924 = vmatpush1.msra.mxu0 0.0
      %925 = vmatprep.subr.mxu0 0.0
      %926 = vmatpush1.msra.mxu0 0.0
      %927 = vmatprep.subr.mxu0 0.0
      %928 = vmatpush1.msra.mxu0 0.0
      %929 = vmatprep.subr.mxu0 0.0
      %930 = vmatpush1.msra.mxu0 0.0
      %931 = vmatprep.subr.mxu0 0.0
      %932 = vmatpush1.msra.mxu0 0.0
      %933 = vmatprep.subr.mxu0 0.0
      %934 = vmatpush1.msra.mxu0 0.0
      %935 = vmatprep.subr.mxu0 0.0
      %936 = vmatpush1.msra.mxu0 0.0
      %937 = vmatprep.mubr.f32.mxu0 0.0
      %938 = vmatmul.mubr.f32.gmra.mrb[0].mxu0 %v871
      %v939 = vpop.f32.mrb[0].mxu0
      %v940 = vadd.f32 %v867, %v939
      %v941 = vpop.f32.mrb[0].mxu0
      %942 = vdwg.mxu0
      %v943 = vld [vmem:[%s6] sm:$0xff]
      %944 = vrot.lane.b32.xlu0 %v416, 124
      %v945 = vpop.permute.xlu0 %944
      %v948 = vsel %vm869, %v943, 0
      %950 = vmatprep.subr.mxu0 0.0
      %951 = vmatpush1.msra.mxu0 %v940
      %952 = vmatprep.subr.mxu0 0.0
      %953 = vmatpush1.msra.mxu0 0.0
      %954 = vmatprep.subr.mxu0 0.0
      %955 = vmatpush1.msra.mxu0 0.0
      %956 = vmatprep.subr.mxu0 0.0
      %957 = vmatpush1.msra.mxu0 0.0
      %958 = vmatprep.subr.mxu0 0.0
      %959 = vmatpush1.msra.mxu0 0.0
      %960 = vmatprep.subr.mxu0 0.0
      %961 = vmatpush1.msra.mxu0 0.0
      %962 = vmatprep.subr.mxu0 0.0
      %963 = vmatpush1.msra.mxu0 0.0
      %964 = vmatprep.subr.mxu0 0.0
      %965 = vmatpush1.msra.mxu0 0.0
      %966 = vmatprep.subr.mxu0 0.0
      %967 = vmatpush1.msra.mxu0 0.0
      %968 = vmatprep.subr.mxu0 0.0
      %969 = vmatpush1.msra.mxu0 0.0
      %970 = vmatprep.subr.mxu0 0.0
      %971 = vmatpush1.msra.mxu0 0.0
      %972 = vmatprep.subr.mxu0 0.0
      %973 = vmatpush1.msra.mxu0 0.0
      %974 = vmatprep.subr.mxu0 0.0
      %975 = vmatpush1.msra.mxu0 0.0
      %976 = vmatprep.subr.mxu0 0.0
      %977 = vmatpush1.msra.mxu0 0.0
      %978 = vmatprep.subr.mxu0 0.0
      %979 = vmatpush1.msra.mxu0 0.0
      %980 = vmatprep.subr.mxu0 0.0
      %981 = vmatpush1.msra.mxu0 0.0
      %982 = vmatprep.subr.mxu0 0.0
      %983 = vmatpush1.msra.mxu0 0.0
      %984 = vmatprep.subr.mxu0 0.0
      %985 = vmatpush1.msra.mxu0 0.0
      %986 = vmatprep.subr.mxu0 0.0
      %987 = vmatpush1.msra.mxu0 0.0
      %988 = vmatprep.subr.mxu0 0.0
      %989 = vmatpush1.msra.mxu0 0.0
      %990 = vmatprep.subr.mxu0 0.0
      %991 = vmatpush1.msra.mxu0 0.0
      %992 = vmatprep.subr.mxu0 0.0
      %993 = vmatpush1.msra.mxu0 0.0
      %994 = vmatprep.subr.mxu0 0.0
      %995 = vmatpush1.msra.mxu0 0.0
      %996 = vmatprep.subr.mxu0 0.0
      %997 = vmatpush1.msra.mxu0 0.0
      %998 = vmatprep.subr.mxu0 0.0
      %999 = vmatpush1.msra.mxu0 0.0
      %1000 = vmatprep.subr.mxu0 0.0
      %1001 = vmatpush1.msra.mxu0 0.0
      %1002 = vmatprep.subr.mxu0 0.0
      %1003 = vmatpush1.msra.mxu0 0.0
      %1004 = vmatprep.subr.mxu0 0.0
      %1005 = vmatpush1.msra.mxu0 0.0
      %1006 = vmatprep.subr.mxu0 0.0
      %1007 = vmatpush1.msra.mxu0 0.0
      %1008 = vmatprep.subr.mxu0 0.0
      %1009 = vmatpush1.msra.mxu0 0.0
      %1010 = vmatprep.subr.mxu0 0.0
      %1011 = vmatpush1.msra.mxu0 0.0
      %1012 = vmatprep.subr.mxu0 0.0
      %1013 = vmatpush1.msra.mxu0 0.0
      %1014 = vmatprep.mubr.f32.mxu0 0.0
      %1015 = vmatmul.mubr.f32.gmra.mrb[0].mxu0 %v948
      %v1016 = vpop.f32.mrb[0].mxu0
      %v1017 = vadd.f32 %v945, %v1016
      %v1018 = vpop.f32.mrb[0].mxu0
      %1019 = vdwg.mxu0
      %v1020 = vld [vmem:[%s7] sm:$0xf]
      %v1021 = vpack.c.bf16 %v728, %v728
      %v1022 = vpack.c.bf16 %v730, %v730
      %1024 = vset.pattern.permute.xlu0 0
      %1025 = vperm.xlu0 %1024, %v1017
      %v1026 = vpop.permute.xlu0 %1025
      %v1029 = vsel %vm869, %v1020, 0
      %v1032 = vsel %vm686, %v1021, 0
      %v1035 = vsel %vm686, %v1022, 0
      %1037 = vmatprep.subr.bf16.mxu0 %v1035
      %1038 = vmatpush1.bf16.msra.mxu0 %v1032
      %1039 = vmatprep.subr.bf16.mxu0 0
      %1040 = vmatpush1.bf16.msra.mxu0 0
      %1041 = vmatprep.subr.bf16.mxu0 0
      %1042 = vmatpush1.bf16.msra.mxu0 0
      %1043 = vmatprep.subr.bf16.mxu0 0
      %1044 = vmatpush1.bf16.msra.mxu0 0
      %1045 = vmatprep.subr.bf16.mxu0 0
      %1046 = vmatpush1.bf16.msra.mxu0 0
      %1047 = vmatprep.subr.bf16.mxu0 0
      %1048 = vmatpush1.bf16.msra.mxu0 0
      %1049 = vmatprep.subr.bf16.mxu0 0
      %1050 = vmatpush1.bf16.msra.mxu0 0
      %1051 = vmatprep.subr.bf16.mxu0 0
      %1052 = vmatpush1.bf16.msra.mxu0 0
      %1053 = vmatprep.subr.bf16.mxu0 0
      %1054 = vmatpush1.bf16.msra.mxu0 0
      %1055 = vmatprep.subr.bf16.mxu0 0
      %1056 = vmatpush1.bf16.msra.mxu0 0
      %1057 = vmatprep.subr.bf16.mxu0 0
      %1058 = vmatpush1.bf16.msra.mxu0 0
      %1059 = vmatprep.subr.bf16.mxu0 0
      %1060 = vmatpush1.bf16.msra.mxu0 0
      %1061 = vmatprep.subr.bf16.mxu0 0
      %1062 = vmatpush1.bf16.msra.mxu0 0
      %1063 = vmatprep.subr.bf16.mxu0 0
      %1064 = vmatpush1.bf16.msra.mxu0 0
      %1065 = vmatprep.subr.bf16.mxu0 0
      %1066 = vmatpush1.bf16.msra.mxu0 0
      %1067 = vmatprep.subr.bf16.mxu0 0
      %1068 = vmatpush1.bf16.msra.mxu0 0
      %1069 = vmatprep.mubr.bf16.mxu0 0
      %1070 = vmatmul.mubr.bf16.gmra.mrb[0].mxu0 %v1029
      %v1071 = vpop.f32.mrb[0].mxu0
      %v1072 = vadd.f32 %v1026, %v1071
      %v1073 = vpop.f32.mrb[0].mxu0
      %v1074 = vadd.f32 %v1026, %v1073
      %v1075 = vpop.f32.mrb[0].mxu0
      %v1076 = vpop.f32.mrb[0].mxu0
      %1077 = vdwg.mxu0
      %v1078 = vmax.f32 %v1072, 0.0
      %v1079 = vmax.f32 %v1074, 0.0
      %v1080 = vld [vmem:[%s8] sm:$0xf]
      %v1081 = vpack.c.bf16 %v1078, %v1078
      %v1082 = vpack.c.bf16 %v1079, %v1079
      %1083 = vset.pattern.permute.xlu0 5
      %1084 = vperm.xlu0 %1083, %v416
      %v1085 = vpop.permute.xlu0 %1084
      %v1088 = vsel %vm869, %v1080, 0
      %v1091 = vsel %vm686, %v1081, 0
      %v1094 = vsel %vm686, %v1082, 0
      %1096 = vmatprep.subr.bf16.mxu0 %v1094
      %1097 = vmatpush1.bf16.msra.mxu0 %v1091
      %1098 = vmatprep.subr.bf16.mxu0 0
      %1099 = vmatpush1.bf16.msra.mxu0 0
      %1100 = vmatprep.subr.bf16.mxu0 0
      %1101 = vmatpush1.bf16.msra.mxu0 0
      %1102 = vmatprep.subr.bf16.mxu0 0
      %1103 = vmatpush1.bf16.msra.mxu0 0
      %1104 = vmatprep.subr.bf16.mxu0 0
      %1105 = vmatpush1.bf16.msra.mxu0 0
      %1106 = vmatprep.subr.bf16.mxu0 0
      %1107 = vmatpush1.bf16.msra.mxu0 0
      %1108 = vmatprep.subr.bf16.mxu0 0
      %1109 = vmatpush1.bf16.msra.mxu0 0
      %1110 = vmatprep.subr.bf16.mxu0 0
      %1111 = vmatpush1.bf16.msra.mxu0 0
      %1112 = vmatprep.subr.bf16.mxu0 0
      %1113 = vmatpush1.bf16.msra.mxu0 0
      %1114 = vmatprep.subr.bf16.mxu0 0
      %1115 = vmatpush1.bf16.msra.mxu0 0
      %1116 = vmatprep.subr.bf16.mxu0 0
      %1117 = vmatpush1.bf16.msra.mxu0 0
      %1118 = vmatprep.subr.bf16.mxu0 0
      %1119 = vmatpush1.bf16.msra.mxu0 0
      %1120 = vmatprep.subr.bf16.mxu0 0
      %1121 = vmatpush1.bf16.msra.mxu0 0
      %1122 = vmatprep.subr.bf16.mxu0 0
      %1123 = vmatpush1.bf16.msra.mxu0 0
      %1124 = vmatprep.subr.bf16.mxu0 0
      %1125 = vmatpush1.bf16.msra.mxu0 0
      %1126 = vmatprep.subr.bf16.mxu0 0
      %1127 = vmatpush1.bf16.msra.mxu0 0
      %1128 = vmatprep.mubr.bf16.mxu0 0
      %1129 = vmatmul.mubr.bf16.gmra.mrb[0].mxu0 %v1088
      %v1130 = vpop.f32.mrb[0].mxu0
      %v1131 = vadd.f32 %v1085, %v1130
      %v1132 = vpop.f32.mrb[0].mxu0
      %v1133 = vadd.f32 %v1085, %v1132
      %v1134 = vpop.f32.mrb[0].mxu0
      %v1135 = vpop.f32.mrb[0].mxu0
      %1136 = vdwg.mxu0
      %v1137 = vsub.f32 0.0, %v1131
      %v1138 = vsub.f32 0.0, %v1133
      %v1139 = vmul.f32 %v1137, 1.442695
      %v1140 = vpow.pop %v1139
      %v1141 = vmul.f32 %v1138, 1.442695
      %v1142 = vpow.pop %v1141
      %v1143 = vadd.f32 %v1140, 1.0
      %v1144 = vadd.f32 %v1142, 1.0
      %v1145 = vrcp.pop %v1143
      %v1146 = vrcp.pop %v1144
      %1148 = vset.pattern.permute.xlu0 0
      %1149 = vperm.xlu0 %1148, %v940
      %v1150 = vpop.permute.xlu0 %1149
      %v1152 = vmul.f32 %v1150, %v1145
      %v1153 = vmul.f32 %v1150, %v1146
      %v1154 = vadd.f32 %v728, %v1152
      %v1155 = vadd.f32 %v730, %v1153
      %1156 = vset.pattern.permute.xlu0 6
      %1157 = vperm.xlu0 %1156, %v416
      %v1158 = vpop.permute.xlu0 %1157
      %v1160 = vmul.f32 %v1154, %v1158
      %v1161 = vmul.f32 %v1155, %v1158
      %1162 = vset.pattern.permute.xlu0 7
      %1163 = vperm.xlu0 %1162, %v416
      %v1164 = vpop.permute.xlu0 %1163
      %v1166 = vadd.f32 %v1160, %v1164
      %v1167 = vadd.f32 %v1161, %v1164
      %v1168 = vmax.f32 %v1166, 0.0
      %v1169 = vmax.f32 %v1167, 0.0
      %v1170 = vld [vmem:[%s9] sm:$0xf]
      %v1171 = vld [vmem:[%s9 + $0x4] sm:$0xf]
      %v1172 = vld [vmem:[%s9 + $0x8] sm:$0xf]
      %v1173 = vld [vmem:[%s9 + $0xc] sm:$0xf]
      %v1174 = vpack.c.bf16 %v1168, %v1168
      %v1175 = vpack.c.bf16 %v1169, %v1169
      %v1180 = vunpack.c.l.b16 %v1170
      %v1181 = vunpack.c.l.b16 %v1171
      %v1182 = vunpack.c.l.b16 %v1172
      %v1183 = vunpack.c.l.b16 %v1173
      %v1184 = vpack.c.b16 %v1181, %v1180
      %v1185 = vpack.c.b16 %v1183, %v1182
      %v1187 = vsel %vm869, %v1184, 0
      %v1190 = vsel %vm869, %v1185, 0
      %v1193 = vsel %vm686, %v1174, 0
      %v1196 = vsel %vm686, %v1175, 0
      %1198 = vmatprep.subr.bf16.mxu0 %v1196
      %1199 = vmatpush1.bf16.msra.mxu0 %v1193
      %1200 = vmatprep.subr.bf16.mxu0 0
      %1201 = vmatpush1.bf16.msra.mxu0 0
      %1202 = vmatprep.subr.bf16.mxu0 0
      %1203 = vmatpush1.bf16.msra.mxu0 0
      %1204 = vmatprep.subr.bf16.mxu0 0
      %1205 = vmatpush1.bf16.msra.mxu0 0
      %1206 = vmatprep.subr.bf16.mxu0 0
      %1207 = vmatpush1.bf16.msra.mxu0 0
      %1208 = vmatprep.subr.bf16.mxu0 0
      %1209 = vmatpush1.bf16.msra.mxu0 0
      %1210 = vmatprep.subr.bf16.mxu0 0
      %1211 = vmatpush1.bf16.msra.mxu0 0
      %1212 = vmatprep.subr.bf16.mxu0 0
      %1213 = vmatpush1.bf16.msra.mxu0 0
      %1214 = vmatprep.subr.bf16.mxu0 0
      %1215 = vmatpush1.bf16.msra.mxu0 0
      %1216 = vmatprep.subr.bf16.mxu0 0
      %1217 = vmatpush1.bf16.msra.mxu0 0
      %1218 = vmatprep.subr.bf16.mxu0 0
      %1219 = vmatpush1.bf16.msra.mxu0 0
      %1220 = vmatprep.subr.bf16.mxu0 0
      %1221 = vmatpush1.bf16.msra.mxu0 0
      %1222 = vmatprep.subr.bf16.mxu0 0
      %1223 = vmatpush1.bf16.msra.mxu0 0
      %1224 = vmatprep.subr.bf16.mxu0 0
      %1225 = vmatpush1.bf16.msra.mxu0 0
      %1226 = vmatprep.subr.bf16.mxu0 0
      %1227 = vmatpush1.bf16.msra.mxu0 0
      %1228 = vmatprep.subr.bf16.mxu0 0
      %1229 = vmatpush1.bf16.msra.mxu0 0
      %1230 = vmatprep.mubr.bf16.mxu0 0
      %1231 = vmatmul.mubr.bf16.gmra.mrb[0].mxu0 %v1187
      %v1232 = vpop.f32.mrb[0].mxu0
      %v1233 = vadd.f32 0.0, %v1232
      %v1234 = vpop.f32.mrb[0].mxu0
      %v1235 = vadd.f32 0.0, %v1234
      %v1236 = vpop.f32.mrb[0].mxu0
      %v1237 = vadd.f32 0.0, %v1236
      %v1238 = vpop.f32.mrb[0].mxu0
      %v1239 = vadd.f32 0.0, %v1238
      %1240 = vmatprep.mubr.bf16.mxu0 0
      %1241 = vmatmul.mubr.bf16.gmra.mrb[0].mxu0 %v1190
      %v1242 = vpop.f32.mrb[0].mxu0
      %v1243 = vadd.f32 0.0, %v1242
      %v1244 = vpop.f32.mrb[0].mxu0
      %v1245 = vadd.f32 0.0, %v1244
      %v1246 = vpop.f32.mrb[0].mxu0
      %v1247 = vadd.f32 0.0, %v1246
      %v1248 = vpop.f32.mrb[0].mxu0
      %v1249 = vadd.f32 0.0, %v1248
      %1250 = vdwg.mxu0
      %1252 = vset.pattern.permute.xlu0 0
      %1253 = vperm.xlu0 %1252, %v417
      %v1254 = vpop.permute.xlu0 %1253
      %1257 = vset.pattern.permute.xlu0 0
      %1258 = vperm.xlu0 %1257, %v418
      %v1259 = vpop.permute.xlu0 %1258
      %1262 = vset.pattern.permute.xlu0 0
      %1263 = vperm.xlu0 %1262, %v419
      %v1264 = vpop.permute.xlu0 %1263
      %1267 = vset.pattern.permute.xlu0 0
      %1268 = vperm.xlu0 %1267, %v420
      %v1269 = vpop.permute.xlu0 %1268
      %v1271 = vmul.f32 %v1233, %v1254
      %v1272 = vmul.f32 %v1235, %v1254
      %v1273 = vmul.f32 %v1237, %v1259
      %v1274 = vmul.f32 %v1239, %v1259
      %v1275 = vmul.f32 %v1243, %v1264
      %v1276 = vmul.f32 %v1245, %v1264
      %v1277 = vmul.f32 %v1247, %v1269
      %v1278 = vmul.f32 %v1249, %v1269
      %1279 = vset.pattern.permute.xlu0 1
      %1280 = vperm.xlu0 %1279, %v417
      %v1281 = vpop.permute.xlu0 %1280
      %1283 = vset.pattern.permute.xlu0 1
      %1284 = vperm.xlu0 %1283, %v418
      %v1285 = vpop.permute.xlu0 %1284
      %1287 = vset.pattern.permute.xlu0 1
      %1288 = vperm.xlu0 %1287, %v419
      %v1289 = vpop.permute.xlu0 %1288
      %1291 = vset.pattern.permute.xlu0 1
      %1292 = vperm.xlu0 %1291, %v420
      %v1293 = vpop.permute.xlu0 %1292
      %v1295 = vadd.f32 %v1271, %v1281
      %v1296 = vadd.f32 %v1272, %v1281
      %v1297 = vadd.f32 %v1273, %v1285
      %v1298 = vadd.f32 %v1274, %v1285
      %v1299 = vadd.f32 %v1275, %v1289
      %v1300 = vadd.f32 %v1276, %v1289
      %v1301 = vadd.f32 %v1277, %v1293
      %v1302 = vadd.f32 %v1278, %v1293
      %v1303 = vadd.f32 %v1295, %v421
      %v1304 = vadd.f32 %v1296, %v422
      %v1305 = vadd.f32 %v1297, %v423
      %v1306 = vadd.f32 %v1298, %v424
      %v1307 = vadd.f32 %v1299, %v425
      %v1308 = vadd.f32 %v1300, %v426
      %v1309 = vadd.f32 %v1301, %v427
      %v1310 = vadd.f32 %v1302, %v428
      %v1311 = vmax.f32 %v1303, 0.0
      %v1312 = vmax.f32 %v1304, 0.0
      %v1313 = vmax.f32 %v1305, 0.0
      %v1314 = vmax.f32 %v1306, 0.0
      %v1315 = vmax.f32 %v1307, 0.0
      %v1316 = vmax.f32 %v1308, 0.0
      %v1317 = vmax.f32 %v1309, 0.0
      %v1318 = vmax.f32 %v1310, 0.0
      %1319 = vst [vmem:[%s413] sm:$0xff] %v1311
      %1320 = vst [vmem:[%s413 + $0x8] sm:$0xff] %v1312
      %1321 = vst [vmem:[%s413 + $0x10] sm:$0xff] %v1313
      %1322 = vst [vmem:[%s413 + $0x18] sm:$0xff] %v1314
      %1323 = vst [vmem:[%s413 + $0x20] sm:$0xff] %v1315
      %1324 = vst [vmem:[%s413 + $0x28] sm:$0xff] %v1316
      %1325 = vst [vmem:[%s413 + $0x30] sm:$0xff] %v1317
      %1326 = vst [vmem:[%s413 + $0x38] sm:$0xff] %v1318
      %p1327 = scmp.lt.s32.totalorder %s23, 1
      %s1328 = scalar_select %p1327, %s23, 1
      %s1329 = smul.addr %s1328, 8
      %s1330 = smul.addr %s1329, 8
      %s1331 = scalar_lea.vmem %s12, %s1330
      // Predicated region
      $region69: #{pixel_aware_bottleneck_forward.1} parent=67 // pred_check
        %p1332 = pneg %p298
      $region70: #{pixel_aware_bottleneck_forward.1} parent=67 // pred_check_branch
        %1334 = sbr.rel (%p1332) target = $region72
      $region71: #{pixel_aware_bottleneck_forward.1} parent=67 // pred_region
        _
      $region72: #{pixel_aware_bottleneck_forward.1} parent=67 // pred_fallthru
        _
    $region68: #{pixel_aware_bottleneck_forward.1} parent=5 // pred_fallthru
      _
    %p1335 = scmp.le.s32.totalorder 2, %s18
    // Predicated region
    $region73: #{pixel_aware_bottleneck_forward.1} parent=5 // pred_check
      %p1336 = pneg %p1335
    $region74: #{pixel_aware_bottleneck_forward.1} parent=5 // pred_check_branch
      %1338 = sbr.rel (%p1336) target = $region76
    $region75: #{pixel_aware_bottleneck_forward.1} parent=5 // pred_region
      %s1339 = ssub.s32 %s18, 2
      // Predicated region
      $region77: #{pixel_aware_bottleneck_forward.1} parent=75 // pred_check
        %p1340 = pneg %p304
      $region78: #{pixel_aware_bottleneck_forward.1} parent=75 // pred_check_branch
        %1342 = sbr.rel (%p1340) target = $region80
      $region79: #{pixel_aware_bottleneck_forward.1} parent=75 // pred_region
        %p1343 = scmp.lt.s32.totalorder %s24, 1
        %s1344 = scalar_select %p1343, %s24, 1
        %s1345 = smul.addr %s1344, 8
        %s1346 = smul.addr %s1345, 8
        %s1347 = scalar_lea.vmem %s12, %s1346
      $region80: #{pixel_aware_bottleneck_forward.1} parent=75 // pred_fallthru
        _
    $region76: #{pixel_aware_bottleneck_forward.1} parent=5 // pred_fallthru
      _
  $region6: #{pixel_aware_bottleneck_forward.1} parent=0 // loop_footer
    %s22 = sadd.s32 1, %s18
  $region7: #{pixel_aware_bottleneck_forward.1} parent=0 // loop_footer_branch
    %17 = sbr.rel target = $region3
  $region8: #{pixel_aware_bottleneck_forward.1} parent=0 // loop_exit
    _

</llo_original>
